<compile_context>
chip_gen: v7x
topology: tpu7x:2x2x1
jax: 0.10.0
libtpu: 0.0.40
codegen_flags: <defaults>
</compile_context>

<pallas_src>
import jax
import jax.numpy as jnp
import numpy as np
from jax.experimental import pallas as pl
from jax.experimental.pallas import tpu as pltpu

EPS = 1e-5


def _round_up(x, m):
    return (x + m - 1) // m * m


def _vmem_limit_bytes():
    """Generation-aware scoped-VMEM budget.

    ~64 MiB on 128-MiB-VMEM chips (v5e/v6e), ~48 MiB on 64-MiB-VMEM chips
    (v7x-class) so the compiler keeps 2-deep pipelining with headroom.
    """
    cap = None
    try:
        cap = int(pltpu.get_tpu_info().vmem_capacity_bytes)
    except Exception:
        cap = None
    if cap is not None and cap <= 64 * 1024 * 1024:
        return 48 * 1024 * 1024
    return 64 * 1024 * 1024


# -----------------------------------------------------------------------------
# Pass 1: single-K-tile GEMM (bf16 -> f32) + per-M-tile partial BN statistics
# -----------------------------------------------------------------------------
def _gemm_stats_kernel(x_ref, w_ref, y_ref, sum_ref, ssq_ref):
    # Full-K reduction in one MXU call: no scratch accumulator, no pl.when
    # init/finalize phases, W block is constant across the grid.
    y = jnp.dot(x_ref[...], w_ref[...], preferred_element_type=jnp.float32)
    y_ref[...] = y.astype(y_ref.dtype)

    # Per-tile partial statistics (one (8, C) slab per M tile -> every grid
    # step writes a distinct output block, so the M axis stays "parallel" and
    # can shard across both TensorCores on v7x).  The column sums are
    # broadcast over the 8 sublanes to keep the block (8, 128)-shaped; the
    # wrapper reads sublane 0.
    csum = jnp.sum(y, axis=0)
    cssq = jnp.sum(y * y, axis=0)
    sum_ref[...] = jnp.broadcast_to(csum, sum_ref.shape)
    ssq_ref[...] = jnp.broadcast_to(cssq, ssq_ref.shape)


# -----------------------------------------------------------------------------
# Pass 2: y * scale + shift  (BN fully folded into two per-channel vectors)
# -----------------------------------------------------------------------------
def _bn_apply_kernel(y_ref, scale_ref, shift_ref, o_ref):
    y = y_ref[...].astype(jnp.float32)
    o_ref[...] = (y * scale_ref[...] + shift_ref[...]).astype(o_ref.dtype)


# -----------------------------------------------------------------------------
# Wrapper: NCHW in / NCHW out, PyTorch weight layout (Cout, Cin, 1, 1)
# -----------------------------------------------------------------------------
def conv1x1_bn_forward(x_nchw, w_oihw, gamma, beta, *, stride, tm=512,
                       out_dtype=jnp.float32):
    n, cin, h, w = x_nchw.shape
    cout = w_oihw.shape[0]
    ho = (h - 1) // stride + 1
    wo = (w - 1) // stride + 1
    m_real = n * ho * wo

    # Subsample FIRST (stride^2 fewer bytes through the transpose), then NHWC.
    # TODO(synk): fold the strided row selection / zero-pad into the pass-1
    # input BlockSpec (strided DMA) so xb never materializes in HBM.
    xs = x_nchw[:, :, ::stride, ::stride]
    x = jnp.transpose(xs, (0, 2, 3, 1)).reshape(m_real, cin)

    # Keep 128-lane granularity (op is HBM-bound; do NOT widen to 256 just to
    # fill the MXU -- that only doubles Y traffic).
    cout_pad = _round_up(cout, 128)
    # Full-K single tile.  Shortcut layers have Cin <= ~2048, which fits.
    # TODO(synk): reintroduce a K grid axis only if Cin grows beyond VMEM.
    k_pad = _round_up(cin, 128)

    vmem_limit = _vmem_limit_bytes()

    # ---- pass-1 M tile: large (>= 512 rows when possible), shrink only if
    # the double-buffered footprint would exceed the VMEM budget.
    tm = max(8, min(tm, _round_up(m_real, 8)))

    def _pass1_bytes(t):
        x_blk = t * k_pad * 2
        w_blk = k_pad * cout_pad * 2
        y_blk = t * cout_pad * 2
        st_blk = 2 * 8 * cout_pad * 4
        return 2 * (x_blk + w_blk + y_blk + st_blk) + t * cout_pad * 4

    while tm > 8 and _pass1_bytes(tm) > int(0.7 * vmem_limit):
        tm = _round_up(tm // 2, 8)

    m_pad = _round_up(m_real, tm)
    nm = m_pad // tm

    # Padded M rows are exactly zero -> contribute nothing to sum / sum-of-sq
    # (the mean/var below divide by m_real, not m_pad).
    xb = jnp.zeros((m_pad, k_pad), jnp.bfloat16).at[:m_real, :cin].set(
        x.astype(jnp.bfloat16))
    wb = jnp.zeros((k_pad, cout_pad), jnp.bfloat16).at[:cin, :cout].set(
        w_oihw[:, :, 0, 0].T.astype(jnp.bfloat16))

    # ---- Pass 1: GEMM + partial statistics ---------------------------------
    y_bf16, part_sum, part_ssq = pl.pallas_call(
        _gemm_stats_kernel,
        out_shape=(jax.ShapeDtypeStruct((m_pad, cout_pad), jnp.bfloat16),
                   jax.ShapeDtypeStruct((nm, 8, cout_pad), jnp.float32),
                   jax.ShapeDtypeStruct((nm, 8, cout_pad), jnp.float32)),
        grid_spec=pltpu.PrefetchScalarGridSpec(
            num_scalar_prefetch=0,
            grid=(nm,),
            in_specs=[
                pl.BlockSpec((tm, k_pad), lambda i: (i, 0)),
                pl.BlockSpec((k_pad, cout_pad), lambda i: (0, 0)),
            ],
            out_specs=(
                pl.BlockSpec((tm, cout_pad), lambda i: (i, 0)),
                pl.BlockSpec((1, 8, cout_pad), lambda i: (i, 0, 0)),
                pl.BlockSpec((1, 8, cout_pad), lambda i: (i, 0, 0)),
            )),
        compiler_params=pltpu.CompilerParams(
            # Every grid step writes distinct output blocks -> fully parallel
            # (megacore-shardable on v7x).
            dimension_semantics=("parallel",),
            vmem_limit_bytes=vmem_limit),
    )(xb, wb)

    # ---- tiny XLA reduce + fold BN into scale/shift vectors ------------------
    inv_m = 1.0 / float(m_real)
    col_sum = part_sum[:, 0, :].sum(axis=0, keepdims=True)      # (1, cout_pad)
    col_ssq = part_ssq[:, 0, :].sum(axis=0, keepdims=True)
    mean = col_sum * inv_m
    # Biased variance (BatchNorm training-mode / track_running_stats=False).
    # TODO(synk): E[y^2]-E[y]^2 is cancellation-prone for huge M with
    # |mean| >> std; switch to per-tile centered (Welford) merge if needed.
    var = jnp.maximum(col_ssq * inv_m - mean * mean, 0.0)
    gb = jnp.zeros((1, cout_pad), jnp.float32).at[0, :cout].set(
        gamma.astype(jnp.float32))
    bb = jnp.zeros((1, cout_pad), jnp.float32).at[0, :cout].set(
        beta.astype(jnp.float32))
    scale = gb * jax.lax.rsqrt(var + EPS)
    shift = bb - mean * scale

    # ---- pass-2 M block: decoupled from tm, as large as the budget allows ---
    out_bytes = jnp.dtype(out_dtype).itemsize
    row_bytes = cout_pad * (2 + out_bytes)
    rows_cap = max(tm, (vmem_limit // 3) // row_bytes)
    f = max(1, min(nm, max(1, 2048 // tm), rows_cap // tm))
    while nm % f:
        f -= 1
    tm2 = tm * f

    out_pad = pl.pallas_call(
        _bn_apply_kernel,
        # out_dtype defaults to f32 to match the PyTorch module; pass
        # jnp.bfloat16 if the consumer accepts it (~33% less pass-2 traffic).
        out_shape=jax.ShapeDtypeStruct((m_pad, cout_pad), out_dtype),
        grid_spec=pltpu.PrefetchScalarGridSpec(
            num_scalar_prefetch=0,
            grid=(nm // f,),
            in_specs=[
                pl.BlockSpec((tm2, cout_pad), lambda i: (i, 0)),
                pl.BlockSpec((1, cout_pad), lambda i: (0, 0)),
                pl.BlockSpec((1, cout_pad), lambda i: (0, 0)),
            ],
            out_specs=pl.BlockSpec((tm2, cout_pad), lambda i: (i, 0))),
        compiler_params=pltpu.CompilerParams(
            dimension_semantics=("parallel",),
            vmem_limit_bytes=vmem_limit),
    )(y_bf16, scale, shift)

    out = out_pad[:m_real, :cout].reshape(n, ho, wo, cout)
    return jnp.transpose(out, (0, 3, 1, 2))                      # NHWC -> NCHW


# -----------------------------------------------------------------------------
# Reference (matches the PyTorch module; conv inputs cast to bf16 to mirror the
# kernel's MXU precision -- the f32 module output differs only by bf16 rounding)
# -----------------------------------------------------------------------------
def shortcut_ref(x_nchw, w_oihw, gamma, beta, stride):
    y = jax.lax.conv_general_dilated(
        x_nchw.astype(jnp.bfloat16), w_oihw.astype(jnp.bfloat16),
        (stride, stride), "VALID",
        dimension_numbers=("NCHW", "OIHW", "NCHW"),
        preferred_element_type=jnp.float32)
    mean = jnp.mean(y, axis=(0, 2, 3), keepdims=True)
    var = jnp.mean(jnp.square(y - mean), axis=(0, 2, 3), keepdims=True)
    y = (y - mean) * jax.lax.rsqrt(var + EPS)
    return y * gamma.reshape(1, -1, 1, 1) + beta.reshape(1, -1, 1, 1)


# -----------------------------------------------------------------------------
if __name__ == "__main__":
    key = jax.random.PRNGKey(0)
    kx, kw, kg, kb = jax.random.split(key, 4)

    # Representative shortcut shapes: M = 2*32*32 = 2048 rows -> 4 M-tiles of
    # 512 in pass 1 (exercises the partial-stats merge) and a single 2048-row
    # block in pass 2; channels are 128-lane aligned after padding.
    N, in_planes, planes, stride, H = 2, 256, 64, 2, 64
    x = jax.random.normal(kx, (N, in_planes, H, H), jnp.float32)
    w = 0.05 * jax.random.normal(kw, (planes, in_planes, 1, 1), jnp.float32)
    gamma = 1.0 + 0.1 * jax.random.normal(kg, (planes,), jnp.float32)
    beta = 0.1 * jax.random.normal(kb, (planes,), jnp.float32)

    out = conv1x1_bn_forward(x, w, gamma, beta, stride=stride)
    out = jax.block_until_ready(out)

    ref = jax.block_until_ready(shortcut_ref(x, w, gamma, beta, stride))
    assert out.shape == (N, planes, H // stride, H // stride), out.shape
    np.testing.assert_allclose(np.asarray(out), np.asarray(ref),
                               rtol=1e-2, atol=1e-2)

    print("KERNEL_OK")
</pallas_src>

<mosaic_0001>
module attributes {stable_mosaic.version = 11 : i64} {
  func.func @_gemm_stats_kernel(%arg0: i32, %arg1: memref<512x256xbf16, #tpu.memory_space<vmem>>, %arg2: memref<256x128xbf16, #tpu.memory_space<vmem>>, %arg3: memref<512x128xbf16, #tpu.memory_space<vmem>>, %arg4: memref<1x8x128xf32, #tpu.memory_space<vmem>>, %arg5: memref<1x8x128xf32, #tpu.memory_space<vmem>>) attributes {dimension_semantics = [#tpu.dimension_semantics<parallel>], iteration_bounds = array<i64: 4>, scalar_prefetch = 0 : i64, scratch_operands = 0 : i64, tpu.core_type = #tpu.core_type<tc>, window_params = [{transform_indices = @transform_0, window_bounds = array<i64: 512, 256>}, {pipeline_mode = #tpu.pipeline_mode<synchronous>, transform_indices = @transform_1, window_bounds = array<i64: 256, 128>}, {transform_indices = @transform_2, window_bounds = array<i64: 512, 128>}, {transform_indices = @transform_3, window_bounds = array<i64: 1, 8, 128>}, {transform_indices = @transform_4, window_bounds = array<i64: 1, 8, 128>}]} {
    %c0 = arith.constant 0 : index
    %c0_0 = arith.constant 0 : index
    %0 = vector.load %arg1[%c0, %c0_0] : memref<512x256xbf16, #tpu.memory_space<vmem>>, vector<512x256xbf16>
    %c0_1 = arith.constant 0 : index
    %c0_2 = arith.constant 0 : index
    %1 = vector.load %arg2[%c0_1, %c0_2] : memref<256x128xbf16, #tpu.memory_space<vmem>>, vector<256x128xbf16>
    %cst = arith.constant dense<0.000000e+00> : vector<512x128xf32>
    %2 = tpu.matmul %0, %1, %cst {dimension_numbers = #tpu.dot_dimension_numbers<[1], [0], [0], [1], [0, 0, 1, 1], [], []>} : vector<512x256xbf16>, vector<256x128xbf16>, vector<512x128xf32> -> vector<512x128xf32>
    %3 = arith.truncf %2 : vector<512x128xf32> to vector<512x128xbf16>
    %c0_3 = arith.constant 0 : index
    %c0_4 = arith.constant 0 : index
    %4 = vector.load %arg3[%c0_3, %c0_4] : memref<512x128xbf16, #tpu.memory_space<vmem>>, vector<512x128xbf16>
    tpu.vector_store %arg3[%c0_3, %c0_4], %3 {strides = array<i32>} : memref<512x128xbf16, #tpu.memory_space<vmem>>, vector<512x128xbf16>,
    %cst_5 = arith.constant dense<0.000000e+00> : vector<128xf32>
    %5 = vector.multi_reduction <add>, %2, %cst_5 [0] : vector<512x128xf32> to vector<128xf32>
    %6 = arith.mulf %2, %2 : vector<512x128xf32>
    %cst_6 = arith.constant dense<0.000000e+00> : vector<128xf32>
    %7 = vector.multi_reduction <add>, %6, %cst_6 [0] : vector<512x128xf32> to vector<128xf32>
    %8 = vector.shape_cast %5 : vector<128xf32> to vector<1x1x128xf32>
    %9 = vector.broadcast %8 : vector<1x1x128xf32> to vector<1x8x128xf32>
    %c0_7 = arith.constant 0 : index
    %c0_8 = arith.constant 0 : index
    %c0_9 = arith.constant 0 : index
    %10 = vector.load %arg4[%c0_7, %c0_8, %c0_9] : memref<1x8x128xf32, #tpu.memory_space<vmem>>, vector<1x8x128xf32>
    tpu.vector_store %arg4[%c0_7, %c0_8, %c0_9], %9 {strides = array<i32>} : memref<1x8x128xf32, #tpu.memory_space<vmem>>, vector<1x8x128xf32>,
    %11 = vector.shape_cast %7 : vector<128xf32> to vector<1x1x128xf32>
    %12 = vector.broadcast %11 : vector<1x1x128xf32> to vector<1x8x128xf32>
    %c0_10 = arith.constant 0 : index
    %c0_11 = arith.constant 0 : index
    %c0_12 = arith.constant 0 : index
    %13 = vector.load %arg5[%c0_10, %c0_11, %c0_12] : memref<1x8x128xf32, #tpu.memory_space<vmem>>, vector<1x8x128xf32>
    tpu.vector_store %arg5[%c0_10, %c0_11, %c0_12], %12 {strides = array<i32>} : memref<1x8x128xf32, #tpu.memory_space<vmem>>, vector<1x8x128xf32>,
    return
  }
  func.func @transform_0(%arg0: i32) -> (i32, i32) {
    %c0_i32 = arith.constant 0 : i32
    %c0_i32_0 = arith.constant 0 : i32
    return %arg0, %c0_i32 : i32, i32
  }
  func.func @transform_1(%arg0: i32) -> (i32, i32) {
    %c0_i32 = arith.constant 0 : i32
    %c0_i32_0 = arith.constant 0 : i32
    %c0_i32_1 = arith.constant 0 : i32
    return %c0_i32, %c0_i32_0 : i32, i32
  }
  func.func @transform_2(%arg0: i32) -> (i32, i32) {
    %c0_i32 = arith.constant 0 : i32
    %c0_i32_0 = arith.constant 0 : i32
    return %arg0, %c0_i32 : i32, i32
  }
  func.func @transform_3(%arg0: i32) -> (i32, i32, i32) {
    %c0_i32 = arith.constant 0 : i32
    %c0_i32_0 = arith.constant 0 : i32
    %c0_i32_1 = arith.constant 0 : i32
    return %arg0, %c0_i32, %c0_i32_0 : i32, i32, i32
  }
  func.func @transform_4(%arg0: i32) -> (i32, i32, i32) {
    %c0_i32 = arith.constant 0 : i32
    %c0_i32_0 = arith.constant 0 : i32
    %c0_i32_1 = arith.constant 0 : i32
    return %arg0, %c0_i32, %c0_i32_0 : i32, i32, i32
  }
}

</mosaic_0001>

<llo_original>
// kernel: tpu_custom_call.1
$region0: #{tpu_custom_call.1}
  #allocation0 [shape = 'u32[]', space=smem, size = 0x4, offset = 0x4, fixed_abs, tag = 'smem constant byte address 0x4 - core index']
  #allocation1 [shape = 'u32[144,128]{1,0:T(1,128)}', space=vmem, size = 0x12000, scoped, tag = 'internal scratch']
  %s0 = inlined_call_operand.hbm [shape: bf16[2048,256], index: 0, kind: input, shape index: {}]
  %s1 = inlined_call_operand.hbm [shape: bf16[256,128], index: 1, kind: input, shape index: {}]
  %s2 = inlined_call_operand.hbm [shape: bf16[2048,128], index: 2, kind: output, shape index: {0}]
  %s3 = inlined_call_operand.hbm [shape: f32[4,8,128], index: 3, kind: output, shape index: {1}]
  %s4 = inlined_call_operand.hbm [shape: f32[4,8,128], index: 4, kind: output, shape index: {2}]
  %5 = xla_tuple %s2, %s3, %s4
  %s6 = sld [smem:[#allocation0]]
  $region65: #{tpu_custom_call.1} parent=0
    _
  %s8 = ssub.s32 1, %s6
  %s9 = scalar_select 0, %s8, %s6
  $region1: #{tpu_custom_call.1} parent=0
    #allocation2 [shape = 'u8[524288]{0}', space=vmem, size = 0x80000, scoped, tag = 'input window, operand 0']
    #allocation3 [shape = 's32[2]{0}', space=sflag, size = 0x8, scoped, tag = 'scoped memory for tpu_custom_call.1']
    #allocation4 [shape = 's32[2]{0}', space=sflag, size = 0x8, scoped, tag = 'scoped memory for tpu_custom_call.1']
    #allocation5 [shape = 'u8[65536]{0}', space=vmem, size = 0x10000, scoped, tag = 'input window, operand 1, single buffered']
    #allocation6 [shape = 's32[1]{0}', space=sflag, size = 0x4, scoped, tag = 'scoped memory for tpu_custom_call.1']
    #allocation7 [shape = 'u8[262144]{0}', space=vmem, size = 0x40000, scoped, tag = 'output window, operand 0']
    #allocation8 [shape = 'u8[8192]{0}', space=vmem, size = 0x2000, scoped, tag = 'output window, operand 1']
    #allocation9 [shape = 's32[2]{0}', space=sflag, size = 0x8, scoped, tag = 'scoped memory for tpu_custom_call.1']
    #allocation10 [shape = 'u8[8192]{0}', space=vmem, size = 0x2000, scoped, tag = 'output window, operand 2']
    %10 = vsyncpa [#allocation3], 0
    %s11 = scalar_lea.sflag [#allocation3], 1
    %12 = vsyncpa %s11, 0
    %13 = vsyncpa [#allocation6], 0
    %14 = vsyncpa [#allocation4], 0
    %s15 = scalar_lea.sflag [#allocation4], 1
    %16 = vsyncpa %s15, 0
    %17 = vsyncpa [#allocation9], 0
    %s18 = scalar_lea.sflag [#allocation9], 1
    %19 = vsyncpa %s18, 0
    loop: start=0, step=1, limit=6
    $region2: #{tpu_custom_call.1} parent=1 // loop_pre_header
      _
    $region3: #{tpu_custom_call.1} parent=1 // loop_header
      %s21 = sphi 0, %s25
      %p22 = scmp.ge.s32.totalorder %s21, 6
      %s31 = sphi 0, %s33
      %s34 = sphi 0, %s31
      %s35 = sphi 0, %s34
      %s51 = sphi 0, %s35
      %s55 = sphi 0, %s55
      %s57 = sphi 0, %s55
      %s58 = sphi 0, %s57
      %s72 = sphi 0, %s58
      %s78 = sphi 0, %s80
      %s81 = sphi 0, %s78
      %s82 = sphi 0, %s81
      %s98 = sphi 0, %s82
      %s104 = sphi 0, %s106
      %s107 = sphi 0, %s104
      %s108 = sphi 0, %s107
      %s124 = sphi 0, %s108
      %s130 = sphi 0, %s132
      %s133 = sphi 0, %s130
      %s134 = sphi 0, %s133
      %s150 = sphi 0, %s134
    $region4: #{tpu_custom_call.1} parent=1 // loop_header_branch
      %24 = sbr.rel (%p22) target = $region8
    $region5: #{tpu_custom_call.1} parent=1 // loop_body
      %s26 = ssub.s32 %s21, 1
      %s27 = ssub.s32 %s21, 2
      %s28 = sadd.s32 %s21, 1
      %s29 = ssub.s32 %s21, %s28
      %p30 = scmp.eq.s32.totalorder %s29, 0
      %s32 = sadd.s32 %s31, 1
      %s33 = scalar_select %p30, %s31, %s32
      %p36 = pneg %p30
      %p37 = scmp.eq.s32.totalorder %s21, 3
      %p38 = por %p36, %p37
      %p39 = scmp.ne.s32.totalorder %s31, %s34
      %p40 = scmp.eq.s32.totalorder %s21, 0
      %p41 = por %p39, %p40
      %p42 = scmp.ne.s32.totalorder %s31, %s34
      %p43 = scmp.eq.s32.totalorder %s26, 3
      %p44 = por %p42, %p43
      %p45 = scmp.ne.s32.totalorder %s34, %s35
      %p46 = scmp.eq.s32.totalorder %s26, 0
      %p47 = por %p45, %p46
      %p48 = scmp.ne.s32.totalorder %s34, %s35
      %p49 = scmp.eq.s32.totalorder %s27, 3
      %p50 = por %p48, %p49
      %p52 = scmp.ne.s32.totalorder %s35, %s51
      %p53 = scmp.eq.s32.totalorder %s27, 0
      %p54 = por %p52, %p53
      %s56 = sadd.s32 %s55, 1
      %p59 = scmp.eq.s32.totalorder %s21, 3
      %p60 = scmp.ne.s32.totalorder %s55, %s57
      %p61 = scmp.eq.s32.totalorder %s21, 0
      %p62 = por %p60, %p61
      %p63 = scmp.ne.s32.totalorder %s55, %s57
      %p64 = scmp.eq.s32.totalorder %s26, 3
      %p65 = por %p63, %p64
      %p66 = scmp.ne.s32.totalorder %s57, %s58
      %p67 = scmp.eq.s32.totalorder %s26, 0
      %p68 = por %p66, %p67
      %p69 = scmp.ne.s32.totalorder %s57, %s58
      %p70 = scmp.eq.s32.totalorder %s27, 3
      %p71 = por %p69, %p70
      %p73 = scmp.ne.s32.totalorder %s58, %s72
      %p74 = scmp.eq.s32.totalorder %s27, 0
      %p75 = por %p73, %p74
      %s76 = ssub.s32 %s21, %s28
      %p77 = scmp.eq.s32.totalorder %s76, 0
      %s79 = sadd.s32 %s78, 1
      %s80 = scalar_select %p77, %s78, %s79
      %p83 = pneg %p77
      %p84 = scmp.eq.s32.totalorder %s21, 3
      %p85 = por %p83, %p84
      %p86 = scmp.ne.s32.totalorder %s78, %s81
      %p87 = scmp.eq.s32.totalorder %s21, 0
      %p88 = por %p86, %p87
      %p89 = scmp.ne.s32.totalorder %s78, %s81
      %p90 = scmp.eq.s32.totalorder %s26, 3
      %p91 = por %p89, %p90
      %p92 = scmp.ne.s32.totalorder %s81, %s82
      %p93 = scmp.eq.s32.totalorder %s26, 0
      %p94 = por %p92, %p93
      %p95 = scmp.ne.s32.totalorder %s81, %s82
      %p96 = scmp.eq.s32.totalorder %s27, 3
      %p97 = por %p95, %p96
      %p99 = scmp.ne.s32.totalorder %s82, %s98
      %p100 = scmp.eq.s32.totalorder %s27, 0
      %p101 = por %p99, %p100
      %s102 = ssub.s32 %s21, %s28
      %p103 = scmp.eq.s32.totalorder %s102, 0
      %s105 = sadd.s32 %s104, 1
      %s106 = scalar_select %p103, %s104, %s105
      %p109 = pneg %p103
      %p110 = scmp.eq.s32.totalorder %s21, 3
      %p111 = por %p109, %p110
      %p112 = scmp.ne.s32.totalorder %s104, %s107
      %p113 = scmp.eq.s32.totalorder %s21, 0
      %p114 = por %p112, %p113
      %p115 = scmp.ne.s32.totalorder %s104, %s107
      %p116 = scmp.eq.s32.totalorder %s26, 3
      %p117 = por %p115, %p116
      %p118 = scmp.ne.s32.totalorder %s107, %s108
      %p119 = scmp.eq.s32.totalorder %s26, 0
      %p120 = por %p118, %p119
      %p121 = scmp.ne.s32.totalorder %s107, %s108
      %p122 = scmp.eq.s32.totalorder %s27, 3
      %p123 = por %p121, %p122
      %p125 = scmp.ne.s32.totalorder %s108, %s124
      %p126 = scmp.eq.s32.totalorder %s27, 0
      %p127 = por %p125, %p126
      %s128 = ssub.s32 %s21, %s28
      %p129 = scmp.eq.s32.totalorder %s128, 0
      %s131 = sadd.s32 %s130, 1
      %s132 = scalar_select %p129, %s130, %s131
      %p135 = pneg %p129
      %p136 = scmp.eq.s32.totalorder %s21, 3
      %p137 = por %p135, %p136
      %p138 = scmp.ne.s32.totalorder %s130, %s133
      %p139 = scmp.eq.s32.totalorder %s21, 0
      %p140 = por %p138, %p139
      %p141 = scmp.ne.s32.totalorder %s130, %s133
      %p142 = scmp.eq.s32.totalorder %s26, 3
      %p143 = por %p141, %p142
      %p144 = scmp.ne.s32.totalorder %s133, %s134
      %p145 = scmp.eq.s32.totalorder %s26, 0
      %p146 = por %p144, %p145
      %p147 = scmp.ne.s32.totalorder %s133, %s134
      %p148 = scmp.eq.s32.totalorder %s27, 3
      %p149 = por %p147, %p148
      %p151 = scmp.ne.s32.totalorder %s134, %s150
      %p152 = scmp.eq.s32.totalorder %s27, 0
      %p153 = por %p151, %p152
      %p154 = scmp.le.s32.totalorder 1, %s21
      %p155 = scmp.lt.s32.totalorder %s21, 5
      %p156 = pnand %p154, %p155
      %p157 = pneg %p156
      // Predicated region
      $region9: #{tpu_custom_call.1} parent=5 // pred_check
        _
      $region10: #{tpu_custom_call.1} parent=5 // pred_check_branch
        %159 = sbr.rel (%p156) target = $region12
      $region11: #{tpu_custom_call.1} parent=5 // pred_region
        %s160 = ssub.s32 %s21, 1
        // Predicated region
        $region13: #{tpu_custom_call.1} parent=11 // pred_check
          %p161 = pneg %p68
        $region14: #{tpu_custom_call.1} parent=11 // pred_check_branch
          %163 = sbr.rel (%p161) target = $region16
        $region15: #{tpu_custom_call.1} parent=11 // pred_region
          %s165 = ssub.s32 2048, 2048
          %166 = vsyncadd [#allocation6], %s165
          %s167 = sshll.u32 [#allocation5], 4
          %s168 = int_to_ptr.vmem [resolvable:$true] %s167
          %173 = dma.hbm_to_vmem [thread:$0]  %s1, 2048, %s168, [#allocation6], 64, 64, 4
        $region16: #{tpu_custom_call.1} parent=11 // pred_fallthru
          _
      $region12: #{tpu_custom_call.1} parent=5 // pred_fallthru
        _
      %p174 = scmp.lt.s32.totalorder %s21, 4
      // Predicated region
      $region17: #{tpu_custom_call.1} parent=5 // pred_check
        %p175 = pneg %p174
      $region18: #{tpu_custom_call.1} parent=5 // pred_check_branch
        %177 = sbr.rel (%p175) target = $region20
      $region19: #{tpu_custom_call.1} parent=5 // pred_region
        // Predicated region
        $region21: #{tpu_custom_call.1} parent=19 // pred_check
          %p178 = pneg %p41
        $region22: #{tpu_custom_call.1} parent=19 // pred_check_branch
          %180 = sbr.rel (%p178) target = $region24
        $region23: #{tpu_custom_call.1} parent=19 // pred_region
          %s181 = sand.u32 %s31, 1
          %s182 = scalar_lea.sflag [#allocation3], %s181
          %s183 = sand.u32 %s31, 1
          %s184 = smul.addr %s183, 512
          %s185 = scalar_lea.vmem [#allocation2], %s184
          %s186 = smul.u32 64, %s21
          %s188 = ssub.s32 8192, 8192
          %189 = vsyncadd %s182, %s188
          %s190 = smul.addr %s186, 2
          %s191 = smul.addr %s190, 64
          %s192 = scalar_lea.hbm %s0, %s191
          %s193 = sshll.u32 %s185, 4
          %s194 = int_to_ptr.vmem [resolvable:$true] %s193
          %199 = dma.hbm_to_vmem [thread:$0]  %s192, 8192, %s194, %s182, 128, 128, 8
        $region24: #{tpu_custom_call.1} parent=19 // pred_fallthru
          _
      $region20: #{tpu_custom_call.1} parent=5 // pred_fallthru
        _
      %p200 = scmp.le.s32.totalorder 1, %s21
      %p201 = scmp.lt.s32.totalorder %s21, 5
      %p202 = pnand %p200, %p201
      %p203 = pneg %p202
      // Predicated region
      $region25: #{tpu_custom_call.1} parent=5 // pred_check
        _
      $region26: #{tpu_custom_call.1} parent=5 // pred_check_branch
        %205 = sbr.rel (%p202) target = $region28
      $region27: #{tpu_custom_call.1} parent=5 // pred_region
        %s206 = ssub.s32 %s21, 1
        %s207 = sand.u32 %s34, 1
        %s208 = scalar_lea.sflag [#allocation3], %s207
        %s209 = sand.u32 %s34, 1
        %s210 = smul.addr %s209, 512
        %s211 = scalar_lea.vmem [#allocation2], %s210
        // Predicated region
        $region29: #{tpu_custom_call.1} parent=27 // pred_check
          %p212 = pneg %p47
        $region30: #{tpu_custom_call.1} parent=27 // pred_check_branch
          %214 = sbr.rel (%p212) target = $region32
        $region31: #{tpu_custom_call.1} parent=27 // pred_region
          %215 = dma.done %s208, 8192
        $region32: #{tpu_custom_call.1} parent=27 // pred_fallthru
          _
        // Predicated region
        $region33: #{tpu_custom_call.1} parent=27 // pred_check
          %p216 = pneg %p68
        $region34: #{tpu_custom_call.1} parent=27 // pred_check_branch
          %218 = sbr.rel (%p216) target = $region36
        $region35: #{tpu_custom_call.1} parent=27 // pred_region
          %219 = dma.done [#allocation6], 2048
        $region36: #{tpu_custom_call.1} parent=27 // pred_fallthru
          _
        %s220 = sand.u32 %s34, 1
        %s221 = scalar_lea.sflag [#allocation3], %s220
        %s222 = sand.u32 %s34, 1
        %s223 = smul.addr %s222, 512
        %s224 = scalar_lea.vmem [#allocation2], %s223
        %p225 = pneg %p47
        %p226 = pneg %p44
        %p227 = pneg %p68
        %p228 = pneg %p65
        %p229 = pneg %p94
        %p230 = pneg %p91
        %s231 = sand.u32 %s81, 1
        %s232 = scalar_lea.sflag [#allocation4], %s231
        %s233 = sand.u32 %s81, 1
        %s234 = smul.addr %s233, 256
        %s235 = scalar_lea.vmem [#allocation7], %s234
        %p236 = pneg %p120
        %p237 = pneg %p117
        %s238 = sand.u32 %s26, 1
        %s239 = scalar_lea.sflag [#allocation9], %s238
        %s240 = sand.u32 %s107, 1
        %s241 = smul.addr %s240, 8
        %s242 = scalar_lea.vmem [#allocation8], %s241
        %p243 = pneg %p146
        %p244 = pneg %p143
        %s245 = sand.u32 %s26, 1
        %s246 = scalar_lea.sflag [#allocation9], %s245
        %s247 = sand.u32 %s133, 1
        %s248 = smul.addr %s247, 8
        %s249 = scalar_lea.vmem [#allocation10], %s248
        %s250 = smul.u32 64, %s26
        %s251 = smul.u32 64, %s26
        %v253 = vld [vmem:[%s211] sm:$0xff]
        %v254 = vld [vmem:[%s211 + $0x8] sm:$0xff]
        %v255 = vld [vmem:[%s211 + $0x10] sm:$0xff]
        %v256 = vld [vmem:[%s211 + $0x18] sm:$0xff]
        %v257 = vld [vmem:[%s211 + $0x20] sm:$0xff]
        %v258 = vld [vmem:[%s211 + $0x28] sm:$0xff]
        %v259 = vld [vmem:[%s211 + $0x30] sm:$0xff]
        %v260 = vld [vmem:[%s211 + $0x38] sm:$0xff]
        %v261 = vld [vmem:[%s211 + $0x40] sm:$0xff]
        %v262 = vld [vmem:[%s211 + $0x48] sm:$0xff]
        %v263 = vld [vmem:[%s211 + $0x50] sm:$0xff]
        %v264 = vld [vmem:[%s211 + $0x58] sm:$0xff]
        %v265 = vld [vmem:[%s211 + $0x60] sm:$0xff]
        %v266 = vld [vmem:[%s211 + $0x68] sm:$0xff]
        %v267 = vld [vmem:[%s211 + $0x70] sm:$0xff]
        %v268 = vld [vmem:[%s211 + $0x78] sm:$0xff]
        %v269 = vld [vmem:[%s211 + $0x80] sm:$0xff]
        %v270 = vld [vmem:[%s211 + $0x88] sm:$0xff]
        %v271 = vld [vmem:[%s211 + $0x90] sm:$0xff]
        %v272 = vld [vmem:[%s211 + $0x98] sm:$0xff]
        %v273 = vld [vmem:[%s211 + $0xa0] sm:$0xff]
        %v274 = vld [vmem:[%s211 + $0xa8] sm:$0xff]
        %v275 = vld [vmem:[%s211 + $0xb0] sm:$0xff]
        %v276 = vld [vmem:[%s211 + $0xb8] sm:$0xff]
        %v277 = vld [vmem:[%s211 + $0xc0] sm:$0xff]
        %v278 = vld [vmem:[%s211 + $0xc8] sm:$0xff]
        %v279 = vld [vmem:[%s211 + $0xd0] sm:$0xff]
        %v280 = vld [vmem:[%s211 + $0xd8] sm:$0xff]
        %v281 = vld [vmem:[%s211 + $0xe0] sm:$0xff]
        %v282 = vld [vmem:[%s211 + $0xe8] sm:$0xff]
        %v283 = vld [vmem:[%s211 + $0xf0] sm:$0xff]
        %v284 = vld [vmem:[%s211 + $0xf8] sm:$0xff]
        %v285 = vld [vmem:[%s211 + $0x100] sm:$0xff]
        %v286 = vld [vmem:[%s211 + $0x108] sm:$0xff]
        %v287 = vld [vmem:[%s211 + $0x110] sm:$0xff]
        %v288 = vld [vmem:[%s211 + $0x118] sm:$0xff]
        %v289 = vld [vmem:[%s211 + $0x120] sm:$0xff]
        %v290 = vld [vmem:[%s211 + $0x128] sm:$0xff]
        %v291 = vld [vmem:[%s211 + $0x130] sm:$0xff]
        %v292 = vld [vmem:[%s211 + $0x138] sm:$0xff]
        %v293 = vld [vmem:[%s211 + $0x140] sm:$0xff]
        %v294 = vld [vmem:[%s211 + $0x148] sm:$0xff]
        %v295 = vld [vmem:[%s211 + $0x150] sm:$0xff]
        %v296 = vld [vmem:[%s211 + $0x158] sm:$0xff]
        %v297 = vld [vmem:[%s211 + $0x160] sm:$0xff]
        %v298 = vld [vmem:[%s211 + $0x168] sm:$0xff]
        %v299 = vld [vmem:[%s211 + $0x170] sm:$0xff]
        %v300 = vld [vmem:[%s211 + $0x178] sm:$0xff]
        %v301 = vld [vmem:[%s211 + $0x180] sm:$0xff]
        %v302 = vld [vmem:[%s211 + $0x188] sm:$0xff]
        %v303 = vld [vmem:[%s211 + $0x190] sm:$0xff]
        %v304 = vld [vmem:[%s211 + $0x198] sm:$0xff]
        %v305 = vld [vmem:[%s211 + $0x1a0] sm:$0xff]
        %v306 = vld [vmem:[%s211 + $0x1a8] sm:$0xff]
        %v307 = vld [vmem:[%s211 + $0x1b0] sm:$0xff]
        %v308 = vld [vmem:[%s211 + $0x1b8] sm:$0xff]
        %v309 = vld [vmem:[%s211 + $0x1c0] sm:$0xff]
        %v310 = vld [vmem:[%s211 + $0x1c8] sm:$0xff]
        %v311 = vld [vmem:[%s211 + $0x1d0] sm:$0xff]
        %v312 = vld [vmem:[%s211 + $0x1d8] sm:$0xff]
        %v313 = vld [vmem:[%s211 + $0x1e0] sm:$0xff]
        %v314 = vld [vmem:[%s211 + $0x1e8] sm:$0xff]
        %v315 = vld [vmem:[%s211 + $0x1f0] sm:$0xff]
        %v316 = vld [vmem:[%s211 + $0x1f8] sm:$0xff]
        %v317 = vld [vmem:[#allocation5] sm:$0xf]
        %v318 = vld [vmem:[#allocation5 + $0x4] sm:$0xf]
        %v319 = vld [vmem:[#allocation5 + $0x8] sm:$0xf]
        %v320 = vld [vmem:[#allocation5 + $0xc] sm:$0xf]
        %v321 = vld [vmem:[#allocation5 + $0x10] sm:$0xf]
        %v322 = vld [vmem:[#allocation5 + $0x14] sm:$0xf]
        %v323 = vld [vmem:[#allocation5 + $0x18] sm:$0xf]
        %v324 = vld [vmem:[#allocation5 + $0x1c] sm:$0xf]
        %v325 = vld [vmem:[#allocation5 + $0x20] sm:$0xf]
        %v326 = vld [vmem:[#allocation5 + $0x24] sm:$0xf]
        %v327 = vld [vmem:[#allocation5 + $0x28] sm:$0xf]
        %v328 = vld [vmem:[#allocation5 + $0x2c] sm:$0xf]
        %v329 = vld [vmem:[#allocation5 + $0x30] sm:$0xf]
        %v330 = vld [vmem:[#allocation5 + $0x34] sm:$0xf]
        %v331 = vld [vmem:[#allocation5 + $0x38] sm:$0xf]
        %v332 = vld [vmem:[#allocation5 + $0x3c] sm:$0xf]
        %v333 = vld [vmem:[#allocation5 + $0x40] sm:$0xf]
        %v334 = vld [vmem:[#allocation5 + $0x44] sm:$0xf]
        %v335 = vld [vmem:[#allocation5 + $0x48] sm:$0xf]
        %v336 = vld [vmem:[#allocation5 + $0x4c] sm:$0xf]
        %v337 = vld [vmem:[#allocation5 + $0x50] sm:$0xf]
        %v338 = vld [vmem:[#allocation5 + $0x54] sm:$0xf]
        %v339 = vld [vmem:[#allocation5 + $0x58] sm:$0xf]
        %v340 = vld [vmem:[#allocation5 + $0x5c] sm:$0xf]
        %v341 = vld [vmem:[#allocation5 + $0x60] sm:$0xf]
        %v342 = vld [vmem:[#allocation5 + $0x64] sm:$0xf]
        %v343 = vld [vmem:[#allocation5 + $0x68] sm:$0xf]
        %v344 = vld [vmem:[#allocation5 + $0x6c] sm:$0xf]
        %v345 = vld [vmem:[#allocation5 + $0x70] sm:$0xf]
        %v346 = vld [vmem:[#allocation5 + $0x74] sm:$0xf]
        %v347 = vld [vmem:[#allocation5 + $0x78] sm:$0xf]
        %v348 = vld [vmem:[#allocation5 + $0x7c] sm:$0xf]
        %v413 = vunpack.c.l.b16 %v253
        %v414 = vunpack.c.h.b16 %v253
        %v415 = vunpack.c.l.b16 %v254
        %v416 = vunpack.c.h.b16 %v254
        %v417 = vunpack.c.l.b16 %v255
        %v418 = vunpack.c.h.b16 %v255
        %v419 = vunpack.c.l.b16 %v256
        %v420 = vunpack.c.h.b16 %v256
        %v421 = vunpack.c.l.b16 %v257
        %v422 = vunpack.c.h.b16 %v257
        %v423 = vunpack.c.l.b16 %v258
        %v424 = vunpack.c.h.b16 %v258
        %v425 = vunpack.c.l.b16 %v259
        %v426 = vunpack.c.h.b16 %v259
        %v427 = vunpack.c.l.b16 %v260
        %v428 = vunpack.c.h.b16 %v260
        %v429 = vunpack.c.l.b16 %v261
        %v430 = vunpack.c.h.b16 %v261
        %v431 = vunpack.c.l.b16 %v262
        %v432 = vunpack.c.h.b16 %v262
        %v433 = vunpack.c.l.b16 %v263
        %v434 = vunpack.c.h.b16 %v263
        %v435 = vunpack.c.l.b16 %v264
        %v436 = vunpack.c.h.b16 %v264
        %v437 = vunpack.c.l.b16 %v265
        %v438 = vunpack.c.h.b16 %v265
        %v439 = vunpack.c.l.b16 %v266
        %v440 = vunpack.c.h.b16 %v266
        %v441 = vunpack.c.l.b16 %v267
        %v442 = vunpack.c.h.b16 %v267
        %v443 = vunpack.c.l.b16 %v268
        %v444 = vunpack.c.h.b16 %v268
        %v445 = vunpack.c.l.b16 %v269
        %v446 = vunpack.c.h.b16 %v269
        %v447 = vunpack.c.l.b16 %v270
        %v448 = vunpack.c.h.b16 %v270
        %v449 = vunpack.c.l.b16 %v271
        %v450 = vunpack.c.h.b16 %v271
        %v451 = vunpack.c.l.b16 %v272
        %v452 = vunpack.c.h.b16 %v272
        %v453 = vunpack.c.l.b16 %v273
        %v454 = vunpack.c.h.b16 %v273
        %v455 = vunpack.c.l.b16 %v274
        %v456 = vunpack.c.h.b16 %v274
        %v457 = vunpack.c.l.b16 %v275
        %v458 = vunpack.c.h.b16 %v275
        %v459 = vunpack.c.l.b16 %v276
        %v460 = vunpack.c.h.b16 %v276
        %v461 = vunpack.c.l.b16 %v277
        %v462 = vunpack.c.h.b16 %v277
        %v463 = vunpack.c.l.b16 %v278
        %v464 = vunpack.c.h.b16 %v278
        %v465 = vunpack.c.l.b16 %v279
        %v466 = vunpack.c.h.b16 %v279
        %v467 = vunpack.c.l.b16 %v280
        %v468 = vunpack.c.h.b16 %v280
        %v469 = vunpack.c.l.b16 %v281
        %v470 = vunpack.c.h.b16 %v281
        %v471 = vunpack.c.l.b16 %v282
        %v472 = vunpack.c.h.b16 %v282
        %v473 = vunpack.c.l.b16 %v283
        %v474 = vunpack.c.h.b16 %v283
        %v475 = vunpack.c.l.b16 %v284
        %v476 = vunpack.c.h.b16 %v284
        %v477 = vunpack.c.l.b16 %v285
        %v478 = vunpack.c.h.b16 %v285
        %v479 = vunpack.c.l.b16 %v286
        %v480 = vunpack.c.h.b16 %v286
        %v481 = vunpack.c.l.b16 %v287
        %v482 = vunpack.c.h.b16 %v287
        %v483 = vunpack.c.l.b16 %v288
        %v484 = vunpack.c.h.b16 %v288
        %v485 = vunpack.c.l.b16 %v289
        %v486 = vunpack.c.h.b16 %v289
        %v487 = vunpack.c.l.b16 %v290
        %v488 = vunpack.c.h.b16 %v290
        %v489 = vunpack.c.l.b16 %v291
        %v490 = vunpack.c.h.b16 %v291
        %v491 = vunpack.c.l.b16 %v292
        %v492 = vunpack.c.h.b16 %v292
        %v493 = vunpack.c.l.b16 %v293
        %v494 = vunpack.c.h.b16 %v293
        %v495 = vunpack.c.l.b16 %v294
        %v496 = vunpack.c.h.b16 %v294
        %v497 = vunpack.c.l.b16 %v295
        %v498 = vunpack.c.h.b16 %v295
        %v499 = vunpack.c.l.b16 %v296
        %v500 = vunpack.c.h.b16 %v296
        %v501 = vunpack.c.l.b16 %v297
        %v502 = vunpack.c.h.b16 %v297
        %v503 = vunpack.c.l.b16 %v298
        %v504 = vunpack.c.h.b16 %v298
        %v505 = vunpack.c.l.b16 %v299
        %v506 = vunpack.c.h.b16 %v299
        %v507 = vunpack.c.l.b16 %v300
        %v508 = vunpack.c.h.b16 %v300
        %v509 = vunpack.c.l.b16 %v301
        %v510 = vunpack.c.h.b16 %v301
        %v511 = vunpack.c.l.b16 %v302
        %v512 = vunpack.c.h.b16 %v302
        %v513 = vunpack.c.l.b16 %v303
        %v514 = vunpack.c.h.b16 %v303
        %v515 = vunpack.c.l.b16 %v304
        %v516 = vunpack.c.h.b16 %v304
        %v517 = vunpack.c.l.b16 %v305
        %v518 = vunpack.c.h.b16 %v305
        %v519 = vunpack.c.l.b16 %v306
        %v520 = vunpack.c.h.b16 %v306
        %v521 = vunpack.c.l.b16 %v307
        %v522 = vunpack.c.h.b16 %v307
        %v523 = vunpack.c.l.b16 %v308
        %v524 = vunpack.c.h.b16 %v308
        %v525 = vunpack.c.l.b16 %v309
        %v526 = vunpack.c.h.b16 %v309
        %v527 = vunpack.c.l.b16 %v310
        %v528 = vunpack.c.h.b16 %v310
        %v529 = vunpack.c.l.b16 %v311
        %v530 = vunpack.c.h.b16 %v311
        %v531 = vunpack.c.l.b16 %v312
        %v532 = vunpack.c.h.b16 %v312
        %v533 = vunpack.c.l.b16 %v313
        %v534 = vunpack.c.h.b16 %v313
        %v535 = vunpack.c.l.b16 %v314
        %v536 = vunpack.c.h.b16 %v314
        %v537 = vunpack.c.l.b16 %v315
        %v538 = vunpack.c.h.b16 %v315
        %v539 = vunpack.c.l.b16 %v316
        %v540 = vunpack.c.h.b16 %v316
        %v541 = vpack.c.b16 %v415, %v413
        %v542 = vpack.c.b16 %v416, %v414
        %v543 = vpack.c.b16 %v419, %v417
        %v544 = vpack.c.b16 %v420, %v418
        %v545 = vpack.c.b16 %v423, %v421
        %v546 = vpack.c.b16 %v424, %v422
        %v547 = vpack.c.b16 %v427, %v425
        %v548 = vpack.c.b16 %v428, %v426
        %v549 = vpack.c.b16 %v431, %v429
        %v550 = vpack.c.b16 %v432, %v430
        %v551 = vpack.c.b16 %v435, %v433
        %v552 = vpack.c.b16 %v436, %v434
        %v553 = vpack.c.b16 %v439, %v437
        %v554 = vpack.c.b16 %v440, %v438
        %v555 = vpack.c.b16 %v443, %v441
        %v556 = vpack.c.b16 %v444, %v442
        %v557 = vpack.c.b16 %v447, %v445
        %v558 = vpack.c.b16 %v448, %v446
        %v559 = vpack.c.b16 %v451, %v449
        %v560 = vpack.c.b16 %v452, %v450
        %v561 = vpack.c.b16 %v455, %v453
        %v562 = vpack.c.b16 %v456, %v454
        %v563 = vpack.c.b16 %v459, %v457
        %v564 = vpack.c.b16 %v460, %v458
        %v565 = vpack.c.b16 %v463, %v461
        %v566 = vpack.c.b16 %v464, %v462
        %v567 = vpack.c.b16 %v467, %v465
        %v568 = vpack.c.b16 %v468, %v466
        %v569 = vpack.c.b16 %v471, %v469
        %v570 = vpack.c.b16 %v472, %v470
        %v571 = vpack.c.b16 %v475, %v473
        %v572 = vpack.c.b16 %v476, %v474
        %v573 = vpack.c.b16 %v479, %v477
        %v574 = vpack.c.b16 %v480, %v478
        %v575 = vpack.c.b16 %v483, %v481
        %v576 = vpack.c.b16 %v484, %v482
        %v577 = vpack.c.b16 %v487, %v485
        %v578 = vpack.c.b16 %v488, %v486
        %v579 = vpack.c.b16 %v491, %v489
        %v580 = vpack.c.b16 %v492, %v490
        %v581 = vpack.c.b16 %v495, %v493
        %v582 = vpack.c.b16 %v496, %v494
        %v583 = vpack.c.b16 %v499, %v497
        %v584 = vpack.c.b16 %v500, %v498
        %v585 = vpack.c.b16 %v503, %v501
        %v586 = vpack.c.b16 %v504, %v502
        %v587 = vpack.c.b16 %v507, %v505
        %v588 = vpack.c.b16 %v508, %v506
        %v589 = vpack.c.b16 %v511, %v509
        %v590 = vpack.c.b16 %v512, %v510
        %v591 = vpack.c.b16 %v515, %v513
        %v592 = vpack.c.b16 %v516, %v514
        %v593 = vpack.c.b16 %v519, %v517
        %v594 = vpack.c.b16 %v520, %v518
        %v595 = vpack.c.b16 %v523, %v521
        %v596 = vpack.c.b16 %v524, %v522
        %v597 = vpack.c.b16 %v527, %v525
        %v598 = vpack.c.b16 %v528, %v526
        %v599 = vpack.c.b16 %v531, %v529
        %v600 = vpack.c.b16 %v532, %v530
        %v601 = vpack.c.b16 %v535, %v533
        %v602 = vpack.c.b16 %v536, %v534
        %v603 = vpack.c.b16 %v539, %v537
        %v604 = vpack.c.b16 %v540, %v538
        %v701 = vunpack.c.l.b16 %v317
        %v702 = vunpack.c.l.b16 %v318
        %v703 = vunpack.c.l.b16 %v319
        %v704 = vunpack.c.l.b16 %v320
        %v705 = vunpack.c.l.b16 %v321
        %v706 = vunpack.c.l.b16 %v322
        %v707 = vunpack.c.l.b16 %v323
        %v708 = vunpack.c.l.b16 %v324
        %v709 = vunpack.c.l.b16 %v325
        %v710 = vunpack.c.l.b16 %v326
        %v711 = vunpack.c.l.b16 %v327
        %v712 = vunpack.c.l.b16 %v328
        %v713 = vunpack.c.l.b16 %v329
        %v714 = vunpack.c.l.b16 %v330
        %v715 = vunpack.c.l.b16 %v331
        %v716 = vunpack.c.l.b16 %v332
        %v717 = vunpack.c.l.b16 %v333
        %v718 = vunpack.c.l.b16 %v334
        %v719 = vunpack.c.l.b16 %v335
        %v720 = vunpack.c.l.b16 %v336
        %v721 = vunpack.c.l.b16 %v337
        %v722 = vunpack.c.l.b16 %v338
        %v723 = vunpack.c.l.b16 %v339
        %v724 = vunpack.c.l.b16 %v340
        %v725 = vunpack.c.l.b16 %v341
        %v726 = vunpack.c.l.b16 %v342
        %v727 = vunpack.c.l.b16 %v343
        %v728 = vunpack.c.l.b16 %v344
        %v729 = vunpack.c.l.b16 %v345
        %v730 = vunpack.c.l.b16 %v346
        %v731 = vunpack.c.l.b16 %v347
        %v732 = vunpack.c.l.b16 %v348
        %v733 = vpack.c.b16 %v702, %v701
        %v734 = vpack.c.b16 %v704, %v703
        %v735 = vpack.c.b16 %v706, %v705
        %v736 = vpack.c.b16 %v708, %v707
        %v737 = vpack.c.b16 %v710, %v709
        %v738 = vpack.c.b16 %v712, %v711
        %v739 = vpack.c.b16 %v714, %v713
        %v740 = vpack.c.b16 %v716, %v715
        %v741 = vpack.c.b16 %v718, %v717
        %v742 = vpack.c.b16 %v720, %v719
        %v743 = vpack.c.b16 %v722, %v721
        %v744 = vpack.c.b16 %v724, %v723
        %v745 = vpack.c.b16 %v726, %v725
        %v746 = vpack.c.b16 %v728, %v727
        %v747 = vpack.c.b16 %v730, %v729
        %v748 = vpack.c.b16 %v732, %v731
        %765 = vmatprep.subr.bf16.mxu0 0
        %766 = vmatpush1.bf16.msra.mxu0 %v733
        %767 = vmatprep.subr.bf16.mxu0 0
        %768 = vmatpush1.bf16.msra.mxu0 %v734
        %769 = vmatprep.subr.bf16.mxu0 0
        %770 = vmatpush1.bf16.msra.mxu0 %v735
        %771 = vmatprep.subr.bf16.mxu0 0
        %772 = vmatpush1.bf16.msra.mxu0 %v736
        %773 = vmatprep.subr.bf16.mxu0 0
        %774 = vmatpush1.bf16.msra.mxu0 %v737
        %775 = vmatprep.subr.bf16.mxu0 0
        %776 = vmatpush1.bf16.msra.mxu0 %v738
        %777 = vmatprep.subr.bf16.mxu0 0
        %778 = vmatpush1.bf16.msra.mxu0 %v739
        %779 = vmatprep.subr.bf16.mxu0 0
        %780 = vmatpush1.bf16.msra.mxu0 %v740
        %781 = vmatprep.subr.bf16.mxu0 0
        %782 = vmatpush1.bf16.msra.mxu0 %v741
        %783 = vmatprep.subr.bf16.mxu0 0
        %784 = vmatpush1.bf16.msra.mxu0 %v742
        %785 = vmatprep.subr.bf16.mxu0 0
        %786 = vmatpush1.bf16.msra.mxu0 %v743
        %787 = vmatprep.subr.bf16.mxu0 0
        %788 = vmatpush1.bf16.msra.mxu0 %v744
        %789 = vmatprep.subr.bf16.mxu0 0
        %790 = vmatpush1.bf16.msra.mxu0 %v745
        %791 = vmatprep.subr.bf16.mxu0 0
        %792 = vmatpush1.bf16.msra.mxu0 %v746
        %793 = vmatprep.subr.bf16.mxu0 0
        %794 = vmatpush1.bf16.msra.mxu0 %v747
        %795 = vmatprep.subr.bf16.mxu0 0
        %796 = vmatpush1.bf16.msra.mxu0 %v748
        %797 = vmatprep.mubr.bf16.mxu0 %v542
        %798 = vmatmul.mubr.bf16.gmra.mrb[0].mxu0 %v541
        %v799 = vpop.f32.mrb[0].mxu0
        %v800 = vadd.f32 0.0, %v799
        %v801 = vpop.f32.mrb[0].mxu0
        %v802 = vpop.f32.mrb[0].mxu0
        %v803 = vadd.f32 0.0, %v802
        %v804 = vpop.f32.mrb[0].mxu0
        %805 = vmatprep.mubr.bf16.mxu0 %v544
        %806 = vmatmul.mubr.bf16.gmra.mrb[0].mxu0 %v543
        %v807 = vpop.f32.mrb[0].mxu0
        %v808 = vadd.f32 0.0, %v807
        %v809 = vpop.f32.mrb[0].mxu0
        %v810 = vpop.f32.mrb[0].mxu0
        %v811 = vadd.f32 0.0, %v810
        %v812 = vpop.f32.mrb[0].mxu0
        %813 = vmatprep.mubr.bf16.mxu0 %v546
        %814 = vmatmul.mubr.bf16.gmra.mrb[0].mxu0 %v545
        %v815 = vpop.f32.mrb[0].mxu0
        %v816 = vadd.f32 0.0, %v815
        %v817 = vpop.f32.mrb[0].mxu0
        %v818 = vpop.f32.mrb[0].mxu0
        %v819 = vadd.f32 0.0, %v818
        %v820 = vpop.f32.mrb[0].mxu0
        %821 = vmatprep.mubr.bf16.mxu0 %v548
        %822 = vmatmul.mubr.bf16.gmra.mrb[0].mxu0 %v547
        %v823 = vpop.f32.mrb[0].mxu0
        %v824 = vadd.f32 0.0, %v823
        %v825 = vpop.f32.mrb[0].mxu0
        %v826 = vpop.f32.mrb[0].mxu0
        %v827 = vadd.f32 0.0, %v826
        %v828 = vpop.f32.mrb[0].mxu0
        %829 = vmatprep.mubr.bf16.mxu0 %v550
        %830 = vmatmul.mubr.bf16.gmra.mrb[0].mxu0 %v549
        %v831 = vpop.f32.mrb[0].mxu0
        %v832 = vadd.f32 0.0, %v831
        %v833 = vpop.f32.mrb[0].mxu0
        %v834 = vpop.f32.mrb[0].mxu0
        %v835 = vadd.f32 0.0, %v834
        %v836 = vpop.f32.mrb[0].mxu0
        %837 = vmatprep.mubr.bf16.mxu0 %v552
        %838 = vmatmul.mubr.bf16.gmra.mrb[0].mxu0 %v551
        %v839 = vpop.f32.mrb[0].mxu0
        %v840 = vadd.f32 0.0, %v839
        %v841 = vpop.f32.mrb[0].mxu0
        %v842 = vpop.f32.mrb[0].mxu0
        %v843 = vadd.f32 0.0, %v842
        %v844 = vpop.f32.mrb[0].mxu0
        %845 = vmatprep.mubr.bf16.mxu0 %v554
        %846 = vmatmul.mubr.bf16.gmra.mrb[0].mxu0 %v553
        %v847 = vpop.f32.mrb[0].mxu0
        %v848 = vadd.f32 0.0, %v847
        %v849 = vpop.f32.mrb[0].mxu0
        %v850 = vpop.f32.mrb[0].mxu0
        %v851 = vadd.f32 0.0, %v850
        %v852 = vpop.f32.mrb[0].mxu0
        %853 = vmatprep.mubr.bf16.mxu0 %v556
        %854 = vmatmul.mubr.bf16.gmra.mrb[0].mxu0 %v555
        %v855 = vpop.f32.mrb[0].mxu0
        %v856 = vadd.f32 0.0, %v855
        %v857 = vpop.f32.mrb[0].mxu0
        %v858 = vpop.f32.mrb[0].mxu0
        %v859 = vadd.f32 0.0, %v858
        %v860 = vpop.f32.mrb[0].mxu0
        %861 = vmatprep.mubr.bf16.mxu0 %v558
        %862 = vmatmul.mubr.bf16.gmra.mrb[0].mxu0 %v557
        %v863 = vpop.f32.mrb[0].mxu0
        %v864 = vadd.f32 0.0, %v863
        %v865 = vpop.f32.mrb[0].mxu0
        %v866 = vpop.f32.mrb[0].mxu0
        %v867 = vadd.f32 0.0, %v866
        %v868 = vpop.f32.mrb[0].mxu0
        %869 = vmatprep.mubr.bf16.mxu0 %v560
        %870 = vmatmul.mubr.bf16.gmra.mrb[0].mxu0 %v559
        %v871 = vpop.f32.mrb[0].mxu0
        %v872 = vadd.f32 0.0, %v871
        %v873 = vpop.f32.mrb[0].mxu0
        %v874 = vpop.f32.mrb[0].mxu0
        %v875 = vadd.f32 0.0, %v874
        %v876 = vpop.f32.mrb[0].mxu0
        %877 = vmatprep.mubr.bf16.mxu0 %v562
        %878 = vmatmul.mubr.bf16.gmra.mrb[0].mxu0 %v561
        %v879 = vpop.f32.mrb[0].mxu0
        %v880 = vadd.f32 0.0, %v879
        %v881 = vpop.f32.mrb[0].mxu0
        %v882 = vpop.f32.mrb[0].mxu0
        %v883 = vadd.f32 0.0, %v882
        %v884 = vpop.f32.mrb[0].mxu0
        %885 = vmatprep.mubr.bf16.mxu0 %v564
        %886 = vmatmul.mubr.bf16.gmra.mrb[0].mxu0 %v563
        %v887 = vpop.f32.mrb[0].mxu0
        %v888 = vadd.f32 0.0, %v887
        %v889 = vpop.f32.mrb[0].mxu0
        %v890 = vpop.f32.mrb[0].mxu0
        %v891 = vadd.f32 0.0, %v890
        %v892 = vpop.f32.mrb[0].mxu0
        %893 = vmatprep.mubr.bf16.mxu0 %v566
        %894 = vmatmul.mubr.bf16.gmra.mrb[0].mxu0 %v565
        %v895 = vpop.f32.mrb[0].mxu0
        %v896 = vadd.f32 0.0, %v895
        %v897 = vpop.f32.mrb[0].mxu0
        %v898 = vpop.f32.mrb[0].mxu0
        %v899 = vadd.f32 0.0, %v898
        %v900 = vpop.f32.mrb[0].mxu0
        %901 = vmatprep.mubr.bf16.mxu0 %v568
        %902 = vmatmul.mubr.bf16.gmra.mrb[0].mxu0 %v567
        %v903 = vpop.f32.mrb[0].mxu0
        %v904 = vadd.f32 0.0, %v903
        %v905 = vpop.f32.mrb[0].mxu0
        %v906 = vpop.f32.mrb[0].mxu0
        %v907 = vadd.f32 0.0, %v906
        %v908 = vpop.f32.mrb[0].mxu0
        %909 = vmatprep.mubr.bf16.mxu0 %v570
        %910 = vmatmul.mubr.bf16.gmra.mrb[0].mxu0 %v569
        %v911 = vpop.f32.mrb[0].mxu0
        %v912 = vadd.f32 0.0, %v911
        %v913 = vpop.f32.mrb[0].mxu0
        %v914 = vpop.f32.mrb[0].mxu0
        %v915 = vadd.f32 0.0, %v914
        %v916 = vpop.f32.mrb[0].mxu0
        %917 = vmatprep.mubr.bf16.mxu0 %v572
        %918 = vmatmul.mubr.bf16.gmra.mrb[0].mxu0 %v571
        %v919 = vpop.f32.mrb[0].mxu0
        %v920 = vadd.f32 0.0, %v919
        %v921 = vpop.f32.mrb[0].mxu0
        %v922 = vpop.f32.mrb[0].mxu0
        %v923 = vadd.f32 0.0, %v922
        %v924 = vpop.f32.mrb[0].mxu0
        %925 = vmatprep.mubr.bf16.mxu0 %v574
        %926 = vmatmul.mubr.bf16.gmra.mrb[0].mxu0 %v573
        %v927 = vpop.f32.mrb[0].mxu0
        %v928 = vadd.f32 0.0, %v927
        %v929 = vpop.f32.mrb[0].mxu0
        %v930 = vpop.f32.mrb[0].mxu0
        %v931 = vadd.f32 0.0, %v930
        %v932 = vpop.f32.mrb[0].mxu0
        %933 = vmatprep.mubr.bf16.mxu0 %v576
        %934 = vmatmul.mubr.bf16.gmra.mrb[0].mxu0 %v575
        %v935 = vpop.f32.mrb[0].mxu0
        %v936 = vadd.f32 0.0, %v935
        %v937 = vpop.f32.mrb[0].mxu0
        %v938 = vpop.f32.mrb[0].mxu0
        %v939 = vadd.f32 0.0, %v938
        %v940 = vpop.f32.mrb[0].mxu0
        %941 = vmatprep.mubr.bf16.mxu0 %v578
        %942 = vmatmul.mubr.bf16.gmra.mrb[0].mxu0 %v577
        %v943 = vpop.f32.mrb[0].mxu0
        %v944 = vadd.f32 0.0, %v943
        %v945 = vpop.f32.mrb[0].mxu0
        %v946 = vpop.f32.mrb[0].mxu0
        %v947 = vadd.f32 0.0, %v946
        %v948 = vpop.f32.mrb[0].mxu0
        %949 = vmatprep.mubr.bf16.mxu0 %v580
        %950 = vmatmul.mubr.bf16.gmra.mrb[0].mxu0 %v579
        %v951 = vpop.f32.mrb[0].mxu0
        %v952 = vadd.f32 0.0, %v951
        %v953 = vpop.f32.mrb[0].mxu0
        %v954 = vpop.f32.mrb[0].mxu0
        %v955 = vadd.f32 0.0, %v954
        %v956 = vpop.f32.mrb[0].mxu0
        %957 = vmatprep.mubr.bf16.mxu0 %v582
        %958 = vmatmul.mubr.bf16.gmra.mrb[0].mxu0 %v581
        %v959 = vpop.f32.mrb[0].mxu0
        %v960 = vadd.f32 0.0, %v959
        %v961 = vpop.f32.mrb[0].mxu0
        %v962 = vpop.f32.mrb[0].mxu0
        %v963 = vadd.f32 0.0, %v962
        %v964 = vpop.f32.mrb[0].mxu0
        %965 = vmatprep.mubr.bf16.mxu0 %v584
        %966 = vmatmul.mubr.bf16.gmra.mrb[0].mxu0 %v583
        %v967 = vpop.f32.mrb[0].mxu0
        %v968 = vadd.f32 0.0, %v967
        %v969 = vpop.f32.mrb[0].mxu0
        %v970 = vpop.f32.mrb[0].mxu0
        %v971 = vadd.f32 0.0, %v970
        %v972 = vpop.f32.mrb[0].mxu0
        %973 = vmatprep.mubr.bf16.mxu0 %v586
        %974 = vmatmul.mubr.bf16.gmra.mrb[0].mxu0 %v585
        %v975 = vpop.f32.mrb[0].mxu0
        %v976 = vadd.f32 0.0, %v975
        %v977 = vpop.f32.mrb[0].mxu0
        %v978 = vpop.f32.mrb[0].mxu0
        %v979 = vadd.f32 0.0, %v978
        %v980 = vpop.f32.mrb[0].mxu0
        %981 = vmatprep.mubr.bf16.mxu0 %v588
        %982 = vmatmul.mubr.bf16.gmra.mrb[0].mxu0 %v587
        %v983 = vpop.f32.mrb[0].mxu0
        %v984 = vadd.f32 0.0, %v983
        %v985 = vpop.f32.mrb[0].mxu0
        %v986 = vpop.f32.mrb[0].mxu0
        %v987 = vadd.f32 0.0, %v986
        %v988 = vpop.f32.mrb[0].mxu0
        %989 = vmatprep.mubr.bf16.mxu0 %v590
        %990 = vmatmul.mubr.bf16.gmra.mrb[0].mxu0 %v589
        %v991 = vpop.f32.mrb[0].mxu0
        %v992 = vadd.f32 0.0, %v991
        %v993 = vpop.f32.mrb[0].mxu0
        %v994 = vpop.f32.mrb[0].mxu0
        %v995 = vadd.f32 0.0, %v994
        %v996 = vpop.f32.mrb[0].mxu0
        %997 = vmatprep.mubr.bf16.mxu0 %v592
        %998 = vmatmul.mubr.bf16.gmra.mrb[0].mxu0 %v591
        %v999 = vpop.f32.mrb[0].mxu0
        %v1000 = vadd.f32 0.0, %v999
        %v1001 = vpop.f32.mrb[0].mxu0
        %v1002 = vpop.f32.mrb[0].mxu0
        %v1003 = vadd.f32 0.0, %v1002
        %v1004 = vpop.f32.mrb[0].mxu0
        %1005 = vmatprep.mubr.bf16.mxu0 %v594
        %1006 = vmatmul.mubr.bf16.gmra.mrb[0].mxu0 %v593
        %v1007 = vpop.f32.mrb[0].mxu0
        %v1008 = vadd.f32 0.0, %v1007
        %v1009 = vpop.f32.mrb[0].mxu0
        %v1010 = vpop.f32.mrb[0].mxu0
        %v1011 = vadd.f32 0.0, %v1010
        %v1012 = vpop.f32.mrb[0].mxu0
        %1013 = vmatprep.mubr.bf16.mxu0 %v596
        %1014 = vmatmul.mubr.bf16.gmra.mrb[0].mxu0 %v595
        %v1015 = vpop.f32.mrb[0].mxu0
        %v1016 = vadd.f32 0.0, %v1015
        %v1017 = vpop.f32.mrb[0].mxu0
        %v1018 = vpop.f32.mrb[0].mxu0
        %v1019 = vadd.f32 0.0, %v1018
        %v1020 = vpop.f32.mrb[0].mxu0
        %1021 = vmatprep.mubr.bf16.mxu0 %v598
        %1022 = vmatmul.mubr.bf16.gmra.mrb[0].mxu0 %v597
        %v1023 = vpop.f32.mrb[0].mxu0
        %v1024 = vadd.f32 0.0, %v1023
        %v1025 = vpop.f32.mrb[0].mxu0
        %v1026 = vpop.f32.mrb[0].mxu0
        %v1027 = vadd.f32 0.0, %v1026
        %v1028 = vpop.f32.mrb[0].mxu0
        %1029 = vmatprep.mubr.bf16.mxu0 %v600
        %1030 = vmatmul.mubr.bf16.gmra.mrb[0].mxu0 %v599
        %v1031 = vpop.f32.mrb[0].mxu0
        %v1032 = vadd.f32 0.0, %v1031
        %v1033 = vpop.f32.mrb[0].mxu0
        %v1034 = vpop.f32.mrb[0].mxu0
        %v1035 = vadd.f32 0.0, %v1034
        %v1036 = vpop.f32.mrb[0].mxu0
        %1037 = vmatprep.mubr.bf16.mxu0 %v602
        %1038 = vmatmul.mubr.bf16.gmra.mrb[0].mxu0 %v601
        %v1039 = vpop.f32.mrb[0].mxu0
        %v1040 = vadd.f32 0.0, %v1039
        %v1041 = vpop.f32.mrb[0].mxu0
        %v1042 = vpop.f32.mrb[0].mxu0
        %v1043 = vadd.f32 0.0, %v1042
        %v1044 = vpop.f32.mrb[0].mxu0
        %1045 = vmatprep.mubr.bf16.mxu0 %v604
        %1046 = vmatmul.mubr.bf16.gmra.mrb[0].mxu0 %v603
        %v1047 = vpop.f32.mrb[0].mxu0
        %v1048 = vadd.f32 0.0, %v1047
        %v1049 = vpop.f32.mrb[0].mxu0
        %v1050 = vpop.f32.mrb[0].mxu0
        %v1051 = vadd.f32 0.0, %v1050
        %v1052 = vpop.f32.mrb[0].mxu0
        %1053 = vdwg.mxu0
        %v1054 = vpack.c.bf16 %v803, %v800
        %v1055 = vpack.c.bf16 %v811, %v808
        %v1056 = vpack.c.bf16 %v819, %v816
        %v1057 = vpack.c.bf16 %v827, %v824
        %v1058 = vpack.c.bf16 %v835, %v832
        %v1059 = vpack.c.bf16 %v843, %v840
        %v1060 = vpack.c.bf16 %v851, %v848
        %v1061 = vpack.c.bf16 %v859, %v856
        %v1062 = vpack.c.bf16 %v867, %v864
        %v1063 = vpack.c.bf16 %v875, %v872
        %v1064 = vpack.c.bf16 %v883, %v880
        %v1065 = vpack.c.bf16 %v891, %v888
        %v1066 = vpack.c.bf16 %v899, %v896
        %v1067 = vpack.c.bf16 %v907, %v904
        %v1068 = vpack.c.bf16 %v915, %v912
        %v1069 = vpack.c.bf16 %v923, %v920
        %v1070 = vpack.c.bf16 %v931, %v928
        %v1071 = vpack.c.bf16 %v939, %v936
        %v1072 = vpack.c.bf16 %v947, %v944
        %v1073 = vpack.c.bf16 %v955, %v952
        %v1074 = vpack.c.bf16 %v963, %v960
        %v1075 = vpack.c.bf16 %v971, %v968
        %v1076 = vpack.c.bf16 %v979, %v976
        %v1077 = vpack.c.bf16 %v987, %v984
        %v1078 = vpack.c.bf16 %v995, %v992
        %v1079 = vpack.c.bf16 %v1003, %v1000
        %v1080 = vpack.c.bf16 %v1011, %v1008
        %v1081 = vpack.c.bf16 %v1019, %v1016
        %v1082 = vpack.c.bf16 %v1027, %v1024
        %v1083 = vpack.c.bf16 %v1035, %v1032
        %v1084 = vpack.c.bf16 %v1043, %v1040
        %v1085 = vpack.c.bf16 %v1051, %v1048
        %v1118 = vunpack.c.l.b16 %v1054
        %v1119 = vunpack.c.h.b16 %v1054
        %v1120 = vunpack.c.l.b16 %v1055
        %v1121 = vunpack.c.h.b16 %v1055
        %v1122 = vunpack.c.l.b16 %v1056
        %v1123 = vunpack.c.h.b16 %v1056
        %v1124 = vunpack.c.l.b16 %v1057
        %v1125 = vunpack.c.h.b16 %v1057
        %v1126 = vunpack.c.l.b16 %v1058
        %v1127 = vunpack.c.h.b16 %v1058
        %v1128 = vunpack.c.l.b16 %v1059
        %v1129 = vunpack.c.h.b16 %v1059
        %v1130 = vunpack.c.l.b16 %v1060
        %v1131 = vunpack.c.h.b16 %v1060
        %v1132 = vunpack.c.l.b16 %v1061
        %v1133 = vunpack.c.h.b16 %v1061
        %v1134 = vunpack.c.l.b16 %v1062
        %v1135 = vunpack.c.h.b16 %v1062
        %v1136 = vunpack.c.l.b16 %v1063
        %v1137 = vunpack.c.h.b16 %v1063
        %v1138 = vunpack.c.l.b16 %v1064
        %v1139 = vunpack.c.h.b16 %v1064
        %v1140 = vunpack.c.l.b16 %v1065
        %v1141 = vunpack.c.h.b16 %v1065
        %v1142 = vunpack.c.l.b16 %v1066
        %v1143 = vunpack.c.h.b16 %v1066
        %v1144 = vunpack.c.l.b16 %v1067
        %v1145 = vunpack.c.h.b16 %v1067
        %v1146 = vunpack.c.l.b16 %v1068
        %v1147 = vunpack.c.h.b16 %v1068
        %v1148 = vunpack.c.l.b16 %v1069
        %v1149 = vunpack.c.h.b16 %v1069
        %v1150 = vunpack.c.l.b16 %v1070
        %v1151 = vunpack.c.h.b16 %v1070
        %v1152 = vunpack.c.l.b16 %v1071
        %v1153 = vunpack.c.h.b16 %v1071
        %v1154 = vunpack.c.l.b16 %v1072
        %v1155 = vunpack.c.h.b16 %v1072
        %v1156 = vunpack.c.l.b16 %v1073
        %v1157 = vunpack.c.h.b16 %v1073
        %v1158 = vunpack.c.l.b16 %v1074
        %v1159 = vunpack.c.h.b16 %v1074
        %v1160 = vunpack.c.l.b16 %v1075
        %v1161 = vunpack.c.h.b16 %v1075
        %v1162 = vunpack.c.l.b16 %v1076
        %v1163 = vunpack.c.h.b16 %v1076
        %v1164 = vunpack.c.l.b16 %v1077
        %v1165 = vunpack.c.h.b16 %v1077
        %v1166 = vunpack.c.l.b16 %v1078
        %v1167 = vunpack.c.h.b16 %v1078
        %v1168 = vunpack.c.l.b16 %v1079
        %v1169 = vunpack.c.h.b16 %v1079
        %v1170 = vunpack.c.l.b16 %v1080
        %v1171 = vunpack.c.h.b16 %v1080
        %v1172 = vunpack.c.l.b16 %v1081
        %v1173 = vunpack.c.h.b16 %v1081
        %v1174 = vunpack.c.l.b16 %v1082
        %v1175 = vunpack.c.h.b16 %v1082
        %v1176 = vunpack.c.l.b16 %v1083
        %v1177 = vunpack.c.h.b16 %v1083
        %v1178 = vunpack.c.l.b16 %v1084
        %v1179 = vunpack.c.h.b16 %v1084
        %v1180 = vunpack.c.l.b16 %v1085
        %v1181 = vunpack.c.h.b16 %v1085
        %v1182 = vpack.c.b16 %v1118, %v1118
        %v1183 = vpack.c.b16 %v1119, %v1119
        %v1184 = vpack.c.b16 %v1120, %v1120
        %v1185 = vpack.c.b16 %v1121, %v1121
        %v1186 = vpack.c.b16 %v1122, %v1122
        %v1187 = vpack.c.b16 %v1123, %v1123
        %v1188 = vpack.c.b16 %v1124, %v1124
        %v1189 = vpack.c.b16 %v1125, %v1125
        %v1190 = vpack.c.b16 %v1126, %v1126
        %v1191 = vpack.c.b16 %v1127, %v1127
        %v1192 = vpack.c.b16 %v1128, %v1128
        %v1193 = vpack.c.b16 %v1129, %v1129
        %v1194 = vpack.c.b16 %v1130, %v1130
        %v1195 = vpack.c.b16 %v1131, %v1131
        %v1196 = vpack.c.b16 %v1132, %v1132
        %v1197 = vpack.c.b16 %v1133, %v1133
        %v1198 = vpack.c.b16 %v1134, %v1134
        %v1199 = vpack.c.b16 %v1135, %v1135
        %v1200 = vpack.c.b16 %v1136, %v1136
        %v1201 = vpack.c.b16 %v1137, %v1137
        %v1202 = vpack.c.b16 %v1138, %v1138
        %v1203 = vpack.c.b16 %v1139, %v1139
        %v1204 = vpack.c.b16 %v1140, %v1140
        %v1205 = vpack.c.b16 %v1141, %v1141
        %v1206 = vpack.c.b16 %v1142, %v1142
        %v1207 = vpack.c.b16 %v1143, %v1143
        %v1208 = vpack.c.b16 %v1144, %v1144
        %v1209 = vpack.c.b16 %v1145, %v1145
        %v1210 = vpack.c.b16 %v1146, %v1146
        %v1211 = vpack.c.b16 %v1147, %v1147
        %v1212 = vpack.c.b16 %v1148, %v1148
        %v1213 = vpack.c.b16 %v1149, %v1149
        %v1214 = vpack.c.b16 %v1150, %v1150
        %v1215 = vpack.c.b16 %v1151, %v1151
        %v1216 = vpack.c.b16 %v1152, %v1152
        %v1217 = vpack.c.b16 %v1153, %v1153
        %v1218 = vpack.c.b16 %v1154, %v1154
        %v1219 = vpack.c.b16 %v1155, %v1155
        %v1220 = vpack.c.b16 %v1156, %v1156
        %v1221 = vpack.c.b16 %v1157, %v1157
        %v1222 = vpack.c.b16 %v1158, %v1158
        %v1223 = vpack.c.b16 %v1159, %v1159
        %v1224 = vpack.c.b16 %v1160, %v1160
        %v1225 = vpack.c.b16 %v1161, %v1161
        %v1226 = vpack.c.b16 %v1162, %v1162
        %v1227 = vpack.c.b16 %v1163, %v1163
        %v1228 = vpack.c.b16 %v1164, %v1164
        %v1229 = vpack.c.b16 %v1165, %v1165
        %v1230 = vpack.c.b16 %v1166, %v1166
        %v1231 = vpack.c.b16 %v1167, %v1167
        %v1232 = vpack.c.b16 %v1168, %v1168
        %v1233 = vpack.c.b16 %v1169, %v1169
        %v1234 = vpack.c.b16 %v1170, %v1170
        %v1235 = vpack.c.b16 %v1171, %v1171
        %v1236 = vpack.c.b16 %v1172, %v1172
        %v1237 = vpack.c.b16 %v1173, %v1173
        %v1238 = vpack.c.b16 %v1174, %v1174
        %v1239 = vpack.c.b16 %v1175, %v1175
        %v1240 = vpack.c.b16 %v1176, %v1176
        %v1241 = vpack.c.b16 %v1177, %v1177
        %v1242 = vpack.c.b16 %v1178, %v1178
        %v1243 = vpack.c.b16 %v1179, %v1179
        %v1244 = vpack.c.b16 %v1180, %v1180
        %v1245 = vpack.c.b16 %v1181, %v1181
        %1310 = vst [vmem:[%s235] sm:$0xf] %v1182
        %1311 = vst [vmem:[%s235 + $0x4] sm:$0xf] %v1183
        %1312 = vst [vmem:[%s235 + $0x8] sm:$0xf] %v1184
        %1313 = vst [vmem:[%s235 + $0xc] sm:$0xf] %v1185
        %1314 = vst [vmem:[%s235 + $0x10] sm:$0xf] %v1186
        %1315 = vst [vmem:[%s235 + $0x14] sm:$0xf] %v1187
        %1316 = vst [vmem:[%s235 + $0x18] sm:$0xf] %v1188
        %1317 = vst [vmem:[%s235 + $0x1c] sm:$0xf] %v1189
        %1318 = vst [vmem:[%s235 + $0x20] sm:$0xf] %v1190
        %1319 = vst [vmem:[%s235 + $0x24] sm:$0xf] %v1191
        %1320 = vst [vmem:[%s235 + $0x28] sm:$0xf] %v1192
        %1321 = vst [vmem:[%s235 + $0x2c] sm:$0xf] %v1193
        %1322 = vst [vmem:[%s235 + $0x30] sm:$0xf] %v1194
        %1323 = vst [vmem:[%s235 + $0x34] sm:$0xf] %v1195
        %1324 = vst [vmem:[%s235 + $0x38] sm:$0xf] %v1196
        %1325 = vst [vmem:[%s235 + $0x3c] sm:$0xf] %v1197
        %1326 = vst [vmem:[%s235 + $0x40] sm:$0xf] %v1198
        %1327 = vst [vmem:[%s235 + $0x44] sm:$0xf] %v1199
        %1328 = vst [vmem:[%s235 + $0x48] sm:$0xf] %v1200
        %1329 = vst [vmem:[%s235 + $0x4c] sm:$0xf] %v1201
        %1330 = vst [vmem:[%s235 + $0x50] sm:$0xf] %v1202
        %1331 = vst [vmem:[%s235 + $0x54] sm:$0xf] %v1203
        %1332 = vst [vmem:[%s235 + $0x58] sm:$0xf] %v1204
        %1333 = vst [vmem:[%s235 + $0x5c] sm:$0xf] %v1205
        %1334 = vst [vmem:[%s235 + $0x60] sm:$0xf] %v1206
        %1335 = vst [vmem:[%s235 + $0x64] sm:$0xf] %v1207
        %1336 = vst [vmem:[%s235 + $0x68] sm:$0xf] %v1208
        %1337 = vst [vmem:[%s235 + $0x6c] sm:$0xf] %v1209
        %1338 = vst [vmem:[%s235 + $0x70] sm:$0xf] %v1210
        %1339 = vst [vmem:[%s235 + $0x74] sm:$0xf] %v1211
        %1340 = vst [vmem:[%s235 + $0x78] sm:$0xf] %v1212
        %1341 = vst [vmem:[%s235 + $0x7c] sm:$0xf] %v1213
        %1342 = vst [vmem:[%s235 + $0x80] sm:$0xf] %v1214
        %1343 = vst [vmem:[%s235 + $0x84] sm:$0xf] %v1215
        %1344 = vst [vmem:[%s235 + $0x88] sm:$0xf] %v1216
        %1345 = vst [vmem:[%s235 + $0x8c] sm:$0xf] %v1217
        %1346 = vst [vmem:[%s235 + $0x90] sm:$0xf] %v1218
        %1347 = vst [vmem:[%s235 + $0x94] sm:$0xf] %v1219
        %1348 = vst [vmem:[%s235 + $0x98] sm:$0xf] %v1220
        %1349 = vst [vmem:[%s235 + $0x9c] sm:$0xf] %v1221
        %1350 = vst [vmem:[%s235 + $0xa0] sm:$0xf] %v1222
        %1351 = vst [vmem:[%s235 + $0xa4] sm:$0xf] %v1223
        %1352 = vst [vmem:[%s235 + $0xa8] sm:$0xf] %v1224
        %1353 = vst [vmem:[%s235 + $0xac] sm:$0xf] %v1225
        %1354 = vst [vmem:[%s235 + $0xb0] sm:$0xf] %v1226
        %1355 = vst [vmem:[%s235 + $0xb4] sm:$0xf] %v1227
        %1356 = vst [vmem:[%s235 + $0xb8] sm:$0xf] %v1228
        %1357 = vst [vmem:[%s235 + $0xbc] sm:$0xf] %v1229
        %1358 = vst [vmem:[%s235 + $0xc0] sm:$0xf] %v1230
        %1359 = vst [vmem:[%s235 + $0xc4] sm:$0xf] %v1231
        %1360 = vst [vmem:[%s235 + $0xc8] sm:$0xf] %v1232
        %1361 = vst [vmem:[%s235 + $0xcc] sm:$0xf] %v1233
        %1362 = vst [vmem:[%s235 + $0xd0] sm:$0xf] %v1234
        %1363 = vst [vmem:[%s235 + $0xd4] sm:$0xf] %v1235
        %1364 = vst [vmem:[%s235 + $0xd8] sm:$0xf] %v1236
        %1365 = vst [vmem:[%s235 + $0xdc] sm:$0xf] %v1237
        %1366 = vst [vmem:[%s235 + $0xe0] sm:$0xf] %v1238
        %1367 = vst [vmem:[%s235 + $0xe4] sm:$0xf] %v1239
        %1368 = vst [vmem:[%s235 + $0xe8] sm:$0xf] %v1240
        %1369 = vst [vmem:[%s235 + $0xec] sm:$0xf] %v1241
        %1370 = vst [vmem:[%s235 + $0xf0] sm:$0xf] %v1242
        %1371 = vst [vmem:[%s235 + $0xf4] sm:$0xf] %v1243
        %1372 = vst [vmem:[%s235 + $0xf8] sm:$0xf] %v1244
        %1373 = vst [vmem:[%s235 + $0xfc] sm:$0xf] %v1245
        %v1374 = vadd.f32 %v800, %v803
        %v1375 = vadd.f32 %v1374, %v808
        %v1376 = vadd.f32 %v1375, %v811
        %v1377 = vadd.f32 %v1376, %v816
        %v1378 = vadd.f32 %v1377, %v819
        %v1379 = vadd.f32 %v1378, %v824
        %v1380 = vadd.f32 %v1379, %v827
        %v1381 = vadd.f32 %v1380, %v832
        %v1382 = vadd.f32 %v1381, %v835
        %v1383 = vadd.f32 %v1382, %v840
        %v1384 = vadd.f32 %v1383, %v843
        %v1385 = vadd.f32 %v1384, %v848
        %v1386 = vadd.f32 %v1385, %v851
        %v1387 = vadd.f32 %v1386, %v856
        %v1388 = vadd.f32 %v1387, %v859
        %v1389 = vadd.f32 %v1388, %v864
        %v1390 = vadd.f32 %v1389, %v867
        %v1391 = vadd.f32 %v1390, %v872
        %v1392 = vadd.f32 %v1391, %v875
        %v1393 = vadd.f32 %v1392, %v880
        %v1394 = vadd.f32 %v1393, %v883
        %v1395 = vadd.f32 %v1394, %v888
        %v1396 = vadd.f32 %v1395, %v891
        %v1397 = vadd.f32 %v1396, %v896
        %v1398 = vadd.f32 %v1397, %v899
        %v1399 = vadd.f32 %v1398, %v904
        %v1400 = vadd.f32 %v1399, %v907
        %v1401 = vadd.f32 %v1400, %v912
        %v1402 = vadd.f32 %v1401, %v915
        %v1403 = vadd.f32 %v1402, %v920
        %v1404 = vadd.f32 %v1403, %v923
        %v1405 = vadd.f32 %v1404, %v928
        %v1406 = vadd.f32 %v1405, %v931
        %v1407 = vadd.f32 %v1406, %v936
        %v1408 = vadd.f32 %v1407, %v939
        %v1409 = vadd.f32 %v1408, %v944
        %v1410 = vadd.f32 %v1409, %v947
        %v1411 = vadd.f32 %v1410, %v952
        %v1412 = vadd.f32 %v1411, %v955
        %v1413 = vadd.f32 %v1412, %v960
        %v1414 = vadd.f32 %v1413, %v963
        %v1415 = vadd.f32 %v1414, %v968
        %v1416 = vadd.f32 %v1415, %v971
        %v1417 = vadd.f32 %v1416, %v976
        %v1418 = vadd.f32 %v1417, %v979
        %v1419 = vadd.f32 %v1418, %v984
        %v1420 = vadd.f32 %v1419, %v987
        %v1421 = vadd.f32 %v1420, %v992
        %v1422 = vadd.f32 %v1421, %v995
        %v1423 = vadd.f32 %v1422, %v1000
        %v1424 = vadd.f32 %v1423, %v1003
        %v1425 = vadd.f32 %v1424, %v1008
        %v1426 = vadd.f32 %v1425, %v1011
        %v1427 = vadd.f32 %v1426, %v1016
        %v1428 = vadd.f32 %v1427, %v1019
        %v1429 = vadd.f32 %v1428, %v1024
        %v1430 = vadd.f32 %v1429, %v1027
        %v1431 = vadd.f32 %v1430, %v1032
        %v1432 = vadd.f32 %v1431, %v1035
        %v1433 = vadd.f32 %v1432, %v1040
        %v1434 = vadd.f32 %v1433, %v1043
        %v1435 = vadd.f32 %v1434, %v1048
        %v1436 = vadd.f32 %v1435, %v1051
        %v1437 = vrot.slane %v1436, 4
        %v1438 = vadd.f32 %v1436, %v1437
        %v1439 = vrot.slane %v1438, 2
        %v1440 = vadd.f32 %v1438, %v1439
        %v1441 = vrot.slane %v1440, 1
        %v1442 = vadd.f32 %v1440, %v1441
        %v1443 = vmul.f32 %v800, %v800
        %v1444 = vmul.f32 %v803, %v803
        %v1445 = vmul.f32 %v808, %v808
        %v1446 = vmul.f32 %v811, %v811
        %v1447 = vmul.f32 %v816, %v816
        %v1448 = vmul.f32 %v819, %v819
        %v1449 = vmul.f32 %v824, %v824
        %v1450 = vmul.f32 %v827, %v827
        %v1451 = vmul.f32 %v832, %v832
        %v1452 = vmul.f32 %v835, %v835
        %v1453 = vmul.f32 %v840, %v840
        %v1454 = vmul.f32 %v843, %v843
        %v1455 = vmul.f32 %v848, %v848
        %v1456 = vmul.f32 %v851, %v851
        %v1457 = vmul.f32 %v856, %v856
        %v1458 = vmul.f32 %v859, %v859
        %v1459 = vmul.f32 %v864, %v864
        %v1460 = vmul.f32 %v867, %v867
        %v1461 = vmul.f32 %v872, %v872
        %v1462 = vmul.f32 %v875, %v875
        %v1463 = vmul.f32 %v880, %v880
        %v1464 = vmul.f32 %v883, %v883
        %v1465 = vmul.f32 %v888, %v888
        %v1466 = vmul.f32 %v891, %v891
        %v1467 = vmul.f32 %v896, %v896
        %v1468 = vmul.f32 %v899, %v899
        %v1469 = vmul.f32 %v904, %v904
        %v1470 = vmul.f32 %v907, %v907
        %v1471 = vmul.f32 %v912, %v912
        %v1472 = vmul.f32 %v915, %v915
        %v1473 = vmul.f32 %v920, %v920
        %v1474 = vmul.f32 %v923, %v923
        %v1475 = vmul.f32 %v928, %v928
        %v1476 = vmul.f32 %v931, %v931
        %v1477 = vmul.f32 %v936, %v936
        %v1478 = vmul.f32 %v939, %v939
        %v1479 = vmul.f32 %v944, %v944
        %v1480 = vmul.f32 %v947, %v947
        %v1481 = vmul.f32 %v952, %v952
        %v1482 = vmul.f32 %v955, %v955
        %v1483 = vmul.f32 %v960, %v960
        %v1484 = vmul.f32 %v963, %v963
        %v1485 = vmul.f32 %v968, %v968
        %v1486 = vmul.f32 %v971, %v971
        %v1487 = vmul.f32 %v976, %v976
        %v1488 = vmul.f32 %v979, %v979
        %v1489 = vmul.f32 %v984, %v984
        %v1490 = vmul.f32 %v987, %v987
        %v1491 = vmul.f32 %v992, %v992
        %v1492 = vmul.f32 %v995, %v995
        %v1493 = vmul.f32 %v1000, %v1000
        %v1494 = vmul.f32 %v1003, %v1003
        %v1495 = vmul.f32 %v1008, %v1008
        %v1496 = vmul.f32 %v1011, %v1011
        %v1497 = vmul.f32 %v1016, %v1016
        %v1498 = vmul.f32 %v1019, %v1019
        %v1499 = vmul.f32 %v1024, %v1024
        %v1500 = vmul.f32 %v1027, %v1027
        %v1501 = vmul.f32 %v1032, %v1032
        %v1502 = vmul.f32 %v1035, %v1035
        %v1503 = vmul.f32 %v1040, %v1040
        %v1504 = vmul.f32 %v1043, %v1043
        %v1505 = vmul.f32 %v1048, %v1048
        %v1506 = vmul.f32 %v1051, %v1051
        %v1507 = vadd.f32 %v1443, %v1444
        %v1508 = vadd.f32 %v1507, %v1445
        %v1509 = vadd.f32 %v1508, %v1446
        %v1510 = vadd.f32 %v1509, %v1447
        %v1511 = vadd.f32 %v1510, %v1448
        %v1512 = vadd.f32 %v1511, %v1449
        %v1513 = vadd.f32 %v1512, %v1450
        %v1514 = vadd.f32 %v1513, %v1451
        %v1515 = vadd.f32 %v1514, %v1452
        %v1516 = vadd.f32 %v1515, %v1453
        %v1517 = vadd.f32 %v1516, %v1454
        %v1518 = vadd.f32 %v1517, %v1455
        %v1519 = vadd.f32 %v1518, %v1456
        %v1520 = vadd.f32 %v1519, %v1457
        %v1521 = vadd.f32 %v1520, %v1458
        %v1522 = vadd.f32 %v1521, %v1459
        %v1523 = vadd.f32 %v1522, %v1460
        %v1524 = vadd.f32 %v1523, %v1461
        %v1525 = vadd.f32 %v1524, %v1462
        %v1526 = vadd.f32 %v1525, %v1463
        %v1527 = vadd.f32 %v1526, %v1464
        %v1528 = vadd.f32 %v1527, %v1465
        %v1529 = vadd.f32 %v1528, %v1466
        %v1530 = vadd.f32 %v1529, %v1467
        %v1531 = vadd.f32 %v1530, %v1468
        %v1532 = vadd.f32 %v1531, %v1469
        %v1533 = vadd.f32 %v1532, %v1470
        %v1534 = vadd.f32 %v1533, %v1471
        %v1535 = vadd.f32 %v1534, %v1472
        %v1536 = vadd.f32 %v1535, %v1473
        %v1537 = vadd.f32 %v1536, %v1474
        %v1538 = vadd.f32 %v1537, %v1475
        %v1539 = vadd.f32 %v1538, %v1476
        %v1540 = vadd.f32 %v1539, %v1477
        %v1541 = vadd.f32 %v1540, %v1478
        %v1542 = vadd.f32 %v1541, %v1479
        %v1543 = vadd.f32 %v1542, %v1480
        %v1544 = vadd.f32 %v1543, %v1481
        %v1545 = vadd.f32 %v1544, %v1482
        %v1546 = vadd.f32 %v1545, %v1483
        %v1547 = vadd.f32 %v1546, %v1484
        %v1548 = vadd.f32 %v1547, %v1485
        %v1549 = vadd.f32 %v1548, %v1486
        %v1550 = vadd.f32 %v1549, %v1487
        %v1551 = vadd.f32 %v1550, %v1488
        %v1552 = vadd.f32 %v1551, %v1489
        %v1553 = vadd.f32 %v1552, %v1490
        %v1554 = vadd.f32 %v1553, %v1491
        %v1555 = vadd.f32 %v1554, %v1492
        %v1556 = vadd.f32 %v1555, %v1493
        %v1557 = vadd.f32 %v1556, %v1494
        %v1558 = vadd.f32 %v1557, %v1495
        %v1559 = vadd.f32 %v1558, %v1496
        %v1560 = vadd.f32 %v1559, %v1497
        %v1561 = vadd.f32 %v1560, %v1498
        %v1562 = vadd.f32 %v1561, %v1499
        %v1563 = vadd.f32 %v1562, %v1500
        %v1564 = vadd.f32 %v1563, %v1501
        %v1565 = vadd.f32 %v1564, %v1502
        %v1566 = vadd.f32 %v1565, %v1503
        %v1567 = vadd.f32 %v1566, %v1504
        %v1568 = vadd.f32 %v1567, %v1505
        %v1569 = vadd.f32 %v1568, %v1506
        %v1570 = vrot.slane %v1569, 4
        %v1571 = vadd.f32 %v1569, %v1570
        %v1572 = vrot.slane %v1571, 2
        %v1573 = vadd.f32 %v1571, %v1572
        %v1574 = vrot.slane %v1573, 1
        %v1575 = vadd.f32 %v1573, %v1574
        %1576 = vst [vmem:[%s242] sm:$0xff] %v1442
        %1577 = vst [vmem:[%s249] sm:$0xff] %v1575
        %s1578 = sand.u32 %s81, 1
        %s1579 = scalar_lea.sflag [#allocation4], %s1578
        %s1580 = sand.u32 %s81, 1
        %s1581 = smul.addr %s1580, 256
        %s1582 = scalar_lea.vmem [#allocation7], %s1581
        %s1583 = sand.u32 %s26, 1
        %s1584 = scalar_lea.sflag [#allocation9], %s1583
        %s1585 = sand.u32 %s107, 1
        %s1586 = smul.addr %s1585, 8
        %s1587 = scalar_lea.vmem [#allocation8], %s1586
        %s1588 = sand.u32 %s26, 1
        %s1589 = scalar_lea.sflag [#allocation9], %s1588
        %s1590 = sand.u32 %s133, 1
        %s1591 = smul.addr %s1590, 8
        %s1592 = scalar_lea.vmem [#allocation10], %s1591
        // Predicated region
        $region37: #{tpu_custom_call.1} parent=27 // pred_check
          %p1593 = pneg %p91
        $region38: #{tpu_custom_call.1} parent=27 // pred_check_branch
          %1595 = sbr.rel (%p1593) target = $region40
        $region39: #{tpu_custom_call.1} parent=27 // pred_region
          %s1596 = smul.u32 64, %s26
          %s1598 = ssub.s32 4096, 4096
          %1599 = vsyncadd %s1579, %s1598
          %s1600 = smul.addr %s1596, 64
          %s1601 = scalar_lea.hbm %s2, %s1600
          %s1602 = sshll.u32 %s1582, 4
          %s1603 = int_to_ptr.vmem [resolvable:$true] %s1602
          %1608 = dma.vmem_to_hbm [thread:$0]  %s1603, 4096, %s1601, %s1579, 64, 64, 4
        $region40: #{tpu_custom_call.1} parent=27 // pred_fallthru
          _
        // Predicated region
        $region41: #{tpu_custom_call.1} parent=27 // pred_check
          %p1609 = pneg %p117
        $region42: #{tpu_custom_call.1} parent=27 // pred_check_branch
          %1611 = sbr.rel (%p1609) target = $region44
        $region43: #{tpu_custom_call.1} parent=27 // pred_region
          %s1613 = ssub.s32 128, 128
          %1614 = vsyncadd %s1584, %s1613
          %s1615 = smul.addr %s26, 128
          %s1616 = scalar_lea.hbm %s3, %s1615
          %s1618 = sshll.u32 %s1587, 4
          %s1619 = int_to_ptr.vmem [resolvable:$true] %s1618
          %1621 = dma.vmem_to_hbm [thread:$0]  %s1619, 128, %s1616, %s1584
        $region44: #{tpu_custom_call.1} parent=27 // pred_fallthru
          _
        // Predicated region
        $region45: #{tpu_custom_call.1} parent=27 // pred_check
          %p1622 = pneg %p143
        $region46: #{tpu_custom_call.1} parent=27 // pred_check_branch
          %1624 = sbr.rel (%p1622) target = $region48
        $region47: #{tpu_custom_call.1} parent=27 // pred_region
          %s1626 = ssub.s32 128, 128
          %1627 = vsyncadd %s1589, %s1626
          %s1628 = smul.addr %s26, 128
          %s1629 = scalar_lea.hbm %s4, %s1628
          %s1631 = sshll.u32 %s1592, 4
          %s1632 = int_to_ptr.vmem [resolvable:$true] %s1631
          %1634 = dma.vmem_to_hbm [thread:$0]  %s1632, 128, %s1629, %s1589
        $region48: #{tpu_custom_call.1} parent=27 // pred_fallthru
          _
      $region28: #{tpu_custom_call.1} parent=5 // pred_fallthru
        _
      %p1635 = scmp.le.s32.totalorder 2, %s21
      // Predicated region
      $region49: #{tpu_custom_call.1} parent=5 // pred_check
        %p1636 = pneg %p1635
      $region50: #{tpu_custom_call.1} parent=5 // pred_check_branch
        %1638 = sbr.rel (%p1636) target = $region52
      $region51: #{tpu_custom_call.1} parent=5 // pred_region
        %s1639 = ssub.s32 %s21, 2
        // Predicated region
        $region53: #{tpu_custom_call.1} parent=51 // pred_check
          %p1640 = pneg %p97
        $region54: #{tpu_custom_call.1} parent=51 // pred_check_branch
          %1642 = sbr.rel (%p1640) target = $region56
        $region55: #{tpu_custom_call.1} parent=51 // pred_region
          %s1643 = sand.u32 %s82, 1
          %s1644 = scalar_lea.sflag [#allocation4], %s1643
          %s1645 = sand.u32 %s82, 1
          %s1646 = smul.addr %s1645, 256
          %s1647 = scalar_lea.vmem [#allocation7], %s1646
          %1648 = dma.done %s1644, 4096
        $region56: #{tpu_custom_call.1} parent=51 // pred_fallthru
          _
        // Predicated region
        $region57: #{tpu_custom_call.1} parent=51 // pred_check
          %p1649 = pneg %p123
        $region58: #{tpu_custom_call.1} parent=51 // pred_check_branch
          %1651 = sbr.rel (%p1649) target = $region60
        $region59: #{tpu_custom_call.1} parent=51 // pred_region
          %s1652 = sand.u32 %s27, 1
          %s1653 = scalar_lea.sflag [#allocation9], %s1652
          %s1654 = sand.u32 %s108, 1
          %s1655 = smul.addr %s1654, 8
          %s1656 = scalar_lea.vmem [#allocation8], %s1655
          %1657 = dma.done %s1653, 128
        $region60: #{tpu_custom_call.1} parent=51 // pred_fallthru
          _
        // Predicated region
        $region61: #{tpu_custom_call.1} parent=51 // pred_check
          %p1658 = pneg %p149
        $region62: #{tpu_custom_call.1} parent=51 // pred_check_branch
          %1660 = sbr.rel (%p1658) target = $region64
        $region63: #{tpu_custom_call.1} parent=51 // pred_region
          %s1661 = sand.u32 %s27, 1
          %s1662 = scalar_lea.sflag [#allocation9], %s1661
          %s1663 = sand.u32 %s134, 1
          %s1664 = smul.addr %s1663, 8
          %s1665 = scalar_lea.vmem [#allocation10], %s1664
          %1666 = dma.done %s1662, 128
        $region64: #{tpu_custom_call.1} parent=51 // pred_fallthru
          _
      $region52: #{tpu_custom_call.1} parent=5 // pred_fallthru
        _
    $region6: #{tpu_custom_call.1} parent=1 // loop_footer
      %s25 = sadd.s32 1, %s21
    $region7: #{tpu_custom_call.1} parent=1 // loop_footer_branch
      %20 = sbr.rel target = $region3
    $region8: #{tpu_custom_call.1} parent=1 // loop_exit
      _
    %1667 = vsyncpa [#allocation3], 1
    %s1668 = scalar_lea.sflag [#allocation3], 1
    %1669 = vsyncpa %s1668, 1
    %1670 = vsyncpa [#allocation6], 1
    %1671 = vsyncpa [#allocation4], 1
    %s1672 = scalar_lea.sflag [#allocation4], 1
    %1673 = vsyncpa %s1672, 1
    %1674 = vsyncpa [#allocation9], 1
    %s1675 = scalar_lea.sflag [#allocation9], 1
    %1676 = vsyncpa %s1675, 1

</llo_original>
